<compile_context>
chip_gen: v5e
topology: v5e:2x2
jax: 0.10.0
libtpu: 0.0.40
codegen_flags: <defaults>
</compile_context>

<pallas_src>
import functools

import jax
import jax.numpy as jnp
from jax.experimental import pallas as pl
from jax.experimental.pallas import tpu as pltpu


# ----------------------------------------------------------------------------
# Pallas kernel: full depth-fused transformer, one (batch-tile, layer) step
# per grid point.  Activation is carried across the depth axis in VMEM scratch.
# ----------------------------------------------------------------------------
def fused_transformer_kernel(
    x_ref,                      # (TB*N, D)   input activations (read at l==0)
    g1_ref, be1_ref,            # (1, 1, D)   LayerNorm 1 gamma/beta (f32)
    wqkv_ref,                   # (1, 3*heads, D, dh)    bf16  (q|k|v, head-major)
    wout_ref, bout_ref,         # (1, heads, dh, D) bf16, (1, 1, D) f32
    g2_ref, be2_ref,            # (1, 1, D)   LayerNorm 2 gamma/beta (f32)
    w1_ref, bb1_ref,            # (1, D, mlp) bf16, (1, 1, mlp) f32
    w2_ref, bb2_ref,            # (1, mlp, D) bf16, (1, 1, D) f32
    o_ref,                      # (TB*N, D)   output
    xc_ref,                     # VMEM scratch (TB*N, D) f32 — carried activation
    *, heads, dim_head, seq_len, batch_tile):
    eps = 1e-5
    scale = dim_head ** -0.5
    N = seq_len
    TB = batch_tile
    TBN, D = xc_ref.shape
    l = pl.program_id(1)
    bf16 = jnp.bfloat16
    f32 = jnp.float32

    # Load the fresh batch tile at the first layer of each batch step.
    @pl.when(l == 0)
    def _():
        xc_ref[...] = x_ref[...].astype(f32)

    x = xc_ref[...]                                        # (TBN, D) f32

    def layernorm(t, g_ref, b_ref):
        # Single-pass LN: the two reductions (E[x], E[x^2]) are independent.
        g = g_ref[0]                                       # (1, D)
        b = b_ref[0]
        mu = jnp.mean(t, axis=-1, keepdims=True)
        m2 = jnp.mean(t * t, axis=-1, keepdims=True)
        var = m2 - mu * mu
        return (t - mu) * jax.lax.rsqrt(var + eps) * g + b

    # ---- PreNorm + Attention + residual ------------------------------------
    xn = layernorm(x, g1_ref, be1_ref).astype(bf16)        # (TBN, D) bf16

    # QKV projection as ONE batched MXU matmul.  Heads (and q/k/v) are a
    # leading batch axis of the weight, so no lane-axis slicing / stacking is
    # ever needed: the activations are broadcast along the new major axis
    # (cheap) and q/k/v are leading-axis slices of the result (free).
    xb = jnp.broadcast_to(xn, (3 * heads, TBN, D))         # bf16, major-dim bcast
    qkv = jnp.einsum('hmd,hdk->hmk', xb, wqkv_ref[0],
                     preferred_element_type=f32)           # (3H, TBN, dh) f32

    q = qkv[0:heads] * scale        # scale folded into q (TBN*dh mults, not N*N)
    k = qkv[heads:2 * heads]
    v = qkv[2 * heads:3 * heads].astype(bf16)

    # Attention core: must not mix batch elements -> small static loop over the
    # batch tile.  Per-element slices are sublane-aligned (N % 8 == 0 here).
    # TODO(synk): for real ViT (N=197) pad N to a multiple of 128 and mask the
    # padded keys in the softmax so dots/p are lane-dense.
    ctx_parts = []
    for b in range(TB):
        sl = slice(b * N, (b + 1) * N)
        q_b = q[:, sl, :].astype(bf16)                     # (heads, N, dh)
        k_b = k[:, sl, :].astype(bf16)
        v_b = v[:, sl, :]
        dots = jnp.einsum('hnd,hmd->hnm', q_b, k_b,
                          preferred_element_type=f32)      # (heads, N, N) f32
        dots = dots - jnp.max(dots, axis=-1, keepdims=True)
        e = jnp.exp(dots)
        p = e * pl.reciprocal(jnp.sum(e, axis=-1, keepdims=True), approx=True)
        ctx_parts.append(jnp.einsum('hnm,hmd->hnd', p.astype(bf16), v_b,
                                    preferred_element_type=f32))   # (heads,N,dh)
    ctx = ctx_parts[0] if TB == 1 else jnp.concatenate(ctx_parts, axis=1)
    # ctx: (heads, TBN, dh) f32

    # Output projection: per-head (TBN, dh) @ (dh, D) partials accumulated into
    # ONE f32 (TBN, D) accumulator — no (heads, TBN, D) intermediate and no
    # separate VPU reduction pass (sum over heads == concat @ Wout).
    wout = wout_ref[0]                                     # (heads, dh, D) bf16
    attn_out = None
    for h in range(heads):
        part = jnp.dot(ctx[h].astype(bf16), wout[h],
                       preferred_element_type=f32)         # (TBN, D)
        attn_out = part if attn_out is None else attn_out + part
    x = x + attn_out + bout_ref[0]

    # ---- PreNorm + FeedForward (exact GELU) + residual -----------------------
    # TODO(synk): on v7x (64 MiB VMEM), K-tile the MLP weights (w1/w2) or drop
    # to single-buffering if ViT-L sized weights overflow the scoped budget.
    xn2 = layernorm(x, g2_ref, be2_ref).astype(bf16)
    h1 = jnp.dot(xn2, w1_ref[0], preferred_element_type=f32) + bb1_ref[0]
    h1 = 0.5 * h1 * (1.0 + jax.lax.erf(h1 * 0.7071067811865476))   # erf GELU, f32
    h2 = jnp.dot(h1.astype(bf16), w2_ref[0], preferred_element_type=f32) + bb2_ref[0]
    x = x + h2

    # Carry activation to the next layer; emit only after the last layer.
    xc_ref[...] = x

    @pl.when(l == pl.num_programs(1) - 1)
    def _():
        o_ref[...] = x.astype(o_ref.dtype)


# ----------------------------------------------------------------------------
# Wrapper: single pallas_call, grid = (B // TB, depth).
# ----------------------------------------------------------------------------
def _default_vmem_limit_bytes():
    # ~0.8x physical VMEM: ~102 MiB on v5e/v6e (128 MiB), ~51 MiB on v7x (64 MiB).
    try:
        cap = pltpu.get_tpu_info().vmem_capacity_bytes
        return int(cap * 0.8)
    except Exception:
        return 64 * 1024 * 1024


def transformer_forward(x, stacked_params, *, heads, dim_head, batch_tile=None):
    B, N, D = x.shape
    depth = stacked_params[0].shape[0]
    if batch_tile is None:
        # Largest divisor of B up to 8: amortizes weight DMA over the tile.
        batch_tile = max(t for t in range(1, min(B, 8) + 1) if B % t == 0)
    TB = batch_tile
    assert B % TB == 0, "batch must be divisible by the batch tile"
    # TODO(synk): on v7x with B // TB < 2, add a heads/query-tile parallel grid
    # axis so the second TensorCore has work.

    kernel = functools.partial(fused_transformer_kernel, heads=heads,
                               dim_head=dim_head, seq_len=N, batch_tile=TB)

    def weight_spec(a):
        nd = a.ndim
        return pl.BlockSpec((1,) + a.shape[1:],
                            lambda b, l, _n=nd: (l,) + (0,) * (_n - 1))

    x_flat = x.reshape(B * N, D)            # host-side reshape (free in XLA)

    out_flat = pl.pallas_call(
        kernel,
        out_shape=jax.ShapeDtypeStruct((B * N, D), x.dtype),
        grid=(B // TB, depth),
        in_specs=[pl.BlockSpec((TB * N, D), lambda b, l: (b, 0))]
                 + [weight_spec(a) for a in stacked_params],
        out_specs=pl.BlockSpec((TB * N, D), lambda b, l: (b, 0)),
        scratch_shapes=[pltpu.VMEM((TB * N, D), jnp.float32)],
        compiler_params=pltpu.CompilerParams(
            # batch tiles shard across TensorCores; depth is a carried
            # (resident output / scratch) axis -> arbitrary.
            dimension_semantics=("parallel", "arbitrary"),
            vmem_limit_bytes=_default_vmem_limit_bytes()),
    )(x_flat, *stacked_params)
    return out_flat.reshape(B, N, D)


# ----------------------------------------------------------------------------
# Deterministic synthetic parameters (dropout=0 -> identity at inference).
# Matmul weights in bf16 (MXU-native); LN params / biases in f32.
# Weight layouts (derived from the PyTorch Linear weights):
#   to_qkv.weight.T : (D, 3*inner), columns [q | k | v], each head-major
#     -> kernel layout (3*heads, D, dh), leading axis = (q/k/v major, head minor)
#   to_out.weight.T : (inner, D) -> kernel layout (heads, dh, D)
# ----------------------------------------------------------------------------
def init_layer(key, dim, heads, dim_head, mlp_dim):
    inner = heads * dim_head
    ks = jax.random.split(key, 6)
    g1 = jnp.ones((1, dim), jnp.float32)
    be1 = jnp.zeros((1, dim), jnp.float32)
    wqkv_t = (jax.random.normal(ks[0], (dim, 3 * inner)) * 0.05).astype(jnp.bfloat16)
    wqkv3 = (wqkv_t.reshape(dim, 3, heads, dim_head)
             .transpose(1, 2, 0, 3)
             .reshape(3 * heads, dim, dim_head))                  # (3H, D, dh)
    wout = (jax.random.normal(ks[1], (inner, dim)) * 0.05
            ).astype(jnp.bfloat16).reshape(heads, dim_head, dim)  # (H, dh, D)
    bout = (jax.random.normal(ks[2], (1, dim)) * 0.01).astype(jnp.float32)
    g2 = jnp.ones((1, dim), jnp.float32)
    be2 = jnp.zeros((1, dim), jnp.float32)
    w1 = (jax.random.normal(ks[3], (dim, mlp_dim)) * 0.05).astype(jnp.bfloat16)
    bb1 = (jax.random.normal(ks[4], (1, mlp_dim)) * 0.01).astype(jnp.float32)
    w2 = (jax.random.normal(ks[5], (mlp_dim, dim)) * 0.05).astype(jnp.bfloat16)
    bb2 = jnp.zeros((1, dim), jnp.float32)
    return (g1, be1, wqkv3, wout, bout, g2, be2, w1, bb1, w2, bb2)


# ----------------------------------------------------------------------------
# Pure-JAX f32 reference (mirrors the PyTorch module; same bf16 weight values
# upcast to f32) for a sanity check.
# ----------------------------------------------------------------------------
def layer_ref(x, lp, heads, dim_head):
    g1, be1, wqkv3, wout, bout, g2, be2, w1, bb1, w2, bb2 = lp
    f32 = lambda t: t.astype(jnp.float32)

    def ln(t, g, b):
        mu = t.mean(-1, keepdims=True)
        var = ((t - mu) ** 2).mean(-1, keepdims=True)
        return (t - mu) / jnp.sqrt(var + 1e-5) * g + b

    xn = ln(x, g1[0], be1[0])
    qkv = jnp.einsum('bnd,hdk->bhnk', xn, f32(wqkv3))     # (B, 3H, N, dh)
    q = qkv[:, 0:heads] * dim_head ** -0.5
    k = qkv[:, heads:2 * heads]
    v = qkv[:, 2 * heads:3 * heads]
    dots = jnp.einsum('bhnd,bhmd->bhnm', q, k)
    attn = jax.nn.softmax(dots, axis=-1)
    ctx = jnp.einsum('bhnm,bhmd->bhnd', attn, v)          # (B, H, N, dh)
    proj = jnp.einsum('bhnd,hdk->bnk', ctx, f32(wout))    # (B, N, D)
    x = x + proj + bout[0]
    xn2 = ln(x, g2[0], be2[0])
    h = jax.nn.gelu(xn2 @ f32(w1) + bb1[0], approximate=False)
    x = x + h @ f32(w2) + bb2[0]
    return x


if __name__ == "__main__":
    # Small, module-consistent shapes.
    B, N = 2, 8          # batch, sequence length
    dim = 32             # embedding dim
    depth = 2
    heads, dim_head = 2, 8
    mlp_dim = 64

    key = jax.random.PRNGKey(0)
    kx, kp = jax.random.split(key)
    x = jax.random.normal(kx, (B, N, dim), jnp.float32)

    layers = [init_layer(jax.random.fold_in(kp, i), dim, heads, dim_head, mlp_dim)
              for i in range(depth)]
    # Stack each parameter along a leading depth axis for the fused kernel.
    stacked = [jnp.stack(ws) for ws in zip(*layers)]

    out = transformer_forward(x, stacked, heads=heads, dim_head=dim_head)
    out = jax.block_until_ready(out)

    # Reference check (f32 math, same quantized weights).
    ref = x
    for lp in layers:
        ref = layer_ref(ref, lp, heads, dim_head)
    assert out.shape == (B, N, dim)
    max_err = float(jnp.max(jnp.abs(out - ref)))
    assert max_err < 2e-2, f"mismatch vs pure-JAX reference: max_err={max_err}"

    print("KERNEL_OK")
</pallas_src>

<mosaic_0001>
module attributes {stable_mosaic.version = 11 : i64} {
  func.func @fused_transformer_kernel(%arg0: i32, %arg1: i32, %arg2: memref<16x32xf32, #tpu.memory_space<vmem>>, %arg3: memref<1x1x32xf32, #tpu.memory_space<vmem>>, %arg4: memref<1x1x32xf32, #tpu.memory_space<vmem>>, %arg5: memref<1x6x32x8xbf16, #tpu.memory_space<vmem>>, %arg6: memref<1x2x8x32xbf16, #tpu.memory_space<vmem>>, %arg7: memref<1x1x32xf32, #tpu.memory_space<vmem>>, %arg8: memref<1x1x32xf32, #tpu.memory_space<vmem>>, %arg9: memref<1x1x32xf32, #tpu.memory_space<vmem>>, %arg10: memref<1x32x64xbf16, #tpu.memory_space<vmem>>, %arg11: memref<1x1x64xf32, #tpu.memory_space<vmem>>, %arg12: memref<1x64x32xbf16, #tpu.memory_space<vmem>>, %arg13: memref<1x1x32xf32, #tpu.memory_space<vmem>>, %arg14: memref<16x32xf32, #tpu.memory_space<vmem>>, %arg15: memref<16x32xf32, #tpu.memory_space<vmem>>) attributes {dimension_semantics = [#tpu.dimension_semantics<parallel>, #tpu.dimension_semantics<arbitrary>], iteration_bounds = array<i64: 1, 2>, scalar_prefetch = 0 : i64, scratch_operands = 1 : i64, tpu.core_type = #tpu.core_type<tc>, window_params = [{transform_indices = @transform_0, window_bounds = array<i64: 16, 32>}, {transform_indices = @transform_1, window_bounds = array<i64: 1, 1, 32>}, {transform_indices = @transform_2, window_bounds = array<i64: 1, 1, 32>}, {transform_indices = @transform_3, window_bounds = array<i64: 1, 6, 32, 8>}, {transform_indices = @transform_4, window_bounds = array<i64: 1, 2, 8, 32>}, {transform_indices = @transform_5, window_bounds = array<i64: 1, 1, 32>}, {transform_indices = @transform_6, window_bounds = array<i64: 1, 1, 32>}, {transform_indices = @transform_7, window_bounds = array<i64: 1, 1, 32>}, {transform_indices = @transform_8, window_bounds = array<i64: 1, 32, 64>}, {transform_indices = @transform_9, window_bounds = array<i64: 1, 1, 64>}, {transform_indices = @transform_10, window_bounds = array<i64: 1, 64, 32>}, {transform_indices = @transform_11, window_bounds = array<i64: 1, 1, 32>}, {transform_indices = @transform_12, window_bounds = array<i64: 16, 32>}]} {
    %c0_i32 = arith.constant 0 : i32
    %0 = arith.cmpi eq, %arg1, %c0_i32 : i32
    %1 = arith.extui %0 : i1 to i32
    %c0_i32_0 = arith.constant 0 : i32
    %2 = arith.cmpi ne, %1, %c0_i32_0 : i32
    scf.if %2 {
      %c0_66 = arith.constant 0 : index
      %c0_67 = arith.constant 0 : index
      %154 = vector.load %arg2[%c0_66, %c0_67] : memref<16x32xf32, #tpu.memory_space<vmem>>, vector<16x32xf32>
      %c0_68 = arith.constant 0 : index
      %c0_69 = arith.constant 0 : index
      %155 = vector.load %arg15[%c0_68, %c0_69] : memref<16x32xf32, #tpu.memory_space<vmem>>, vector<16x32xf32>
      tpu.vector_store %arg15[%c0_68, %c0_69], %154 {strides = array<i32>} : memref<16x32xf32, #tpu.memory_space<vmem>>, vector<16x32xf32>,
    } else {
    }
    %c0 = arith.constant 0 : index
    %c0_1 = arith.constant 0 : index
    %3 = vector.load %arg15[%c0, %c0_1] : memref<16x32xf32, #tpu.memory_space<vmem>>, vector<16x32xf32>
    %c0_2 = arith.constant 0 : index
    %c0_3 = arith.constant 0 : index
    %c0_4 = arith.constant 0 : index
    %4 = vector.load %arg3[%c0_2, %c0_3, %c0_4] : memref<1x1x32xf32, #tpu.memory_space<vmem>>, vector<1x1x32xf32>
    %5 = vector.shape_cast %4 : vector<1x1x32xf32> to vector<1x32xf32>
    %c0_5 = arith.constant 0 : index
    %c0_6 = arith.constant 0 : index
    %c0_7 = arith.constant 0 : index
    %6 = vector.load %arg4[%c0_5, %c0_6, %c0_7] : memref<1x1x32xf32, #tpu.memory_space<vmem>>, vector<1x1x32xf32>
    %7 = vector.shape_cast %6 : vector<1x1x32xf32> to vector<1x32xf32>
    %cst = arith.constant dense<0.000000e+00> : vector<16xf32>
    %8 = vector.multi_reduction <add>, %3, %cst [1] : vector<16x32xf32> to vector<16xf32>
    %9 = vector.shape_cast %8 : vector<16xf32> to vector<16x1xf32>
    %cst_8 = arith.constant 3.200000e+01 : f32
    %10 = vector.broadcast %cst_8 : f32 to vector<16x1xf32>
    %11 = arith.divf %9, %10 : vector<16x1xf32>
    %12 = arith.mulf %3, %3 : vector<16x32xf32>
    %cst_9 = arith.constant dense<0.000000e+00> : vector<16xf32>
    %13 = vector.multi_reduction <add>, %12, %cst_9 [1] : vector<16x32xf32> to vector<16xf32>
    %14 = vector.shape_cast %13 : vector<16xf32> to vector<16x1xf32>
    %cst_10 = arith.constant 3.200000e+01 : f32
    %15 = vector.broadcast %cst_10 : f32 to vector<16x1xf32>
    %16 = arith.divf %14, %15 : vector<16x1xf32>
    %17 = arith.mulf %11, %11 : vector<16x1xf32>
    %18 = arith.subf %16, %17 : vector<16x1xf32>
    %19 = vector.broadcast %11 : vector<16x1xf32> to vector<16x32xf32>
    %20 = arith.subf %3, %19 : vector<16x32xf32>
    %cst_11 = arith.constant 9.99999974E-6 : f32
    %21 = vector.broadcast %cst_11 : f32 to vector<16x1xf32>
    %22 = arith.addf %18, %21 : vector<16x1xf32>
    %23 = math.rsqrt %22 : vector<16x1xf32>
    %24 = vector.broadcast %23 : vector<16x1xf32> to vector<16x32xf32>
    %25 = arith.mulf %20, %24 : vector<16x32xf32>
    %26 = vector.broadcast %5 : vector<1x32xf32> to vector<16x32xf32>
    %27 = arith.mulf %25, %26 : vector<16x32xf32>
    %28 = vector.broadcast %7 : vector<1x32xf32> to vector<16x32xf32>
    %29 = arith.addf %27, %28 : vector<16x32xf32>
    %30 = arith.truncf %29 : vector<16x32xf32> to vector<16x32xbf16>
    %31 = vector.shape_cast %30 : vector<16x32xbf16> to vector<1x16x32xbf16>
    %32 = vector.broadcast %31 : vector<1x16x32xbf16> to vector<6x16x32xbf16>
    %c0_12 = arith.constant 0 : index
    %c0_13 = arith.constant 0 : index
    %c0_14 = arith.constant 0 : index
    %c0_15 = arith.constant 0 : index
    %33 = vector.load %arg5[%c0_12, %c0_13, %c0_14, %c0_15] : memref<1x6x32x8xbf16, #tpu.memory_space<vmem>>, vector<1x6x32x8xbf16>
    %34 = vector.shape_cast %33 : vector<1x6x32x8xbf16> to vector<6x32x8xbf16>
    "tpu.trace_start"() <{level = 10 : i32, message = "hmd,hdk->hmk"}> : () -> ()
    %cst_16 = arith.constant dense<0.000000e+00> : vector<6x16x8xf32>
    %35 = tpu.matmul %32, %34, %cst_16 {dimension_numbers = #tpu.dot_dimension_numbers<[2], [1], [1], [2], [0, 0, 0, 1, 1, 2], [0], [0]>} : vector<6x16x32xbf16>, vector<6x32x8xbf16>, vector<6x16x8xf32> -> vector<6x16x8xf32>
    "tpu.trace_stop"() : () -> ()
    %36 = vector.extract_strided_slice %35 {offsets = [0, 0, 0], sizes = [2, 16, 8], strides = [1, 1, 1]} : vector<6x16x8xf32> to vector<2x16x8xf32>
    %cst_17 = arith.constant 0.353553385 : f32
    %37 = vector.broadcast %cst_17 : f32 to vector<2x16x8xf32>
    %38 = arith.mulf %36, %37 : vector<2x16x8xf32>
    %39 = vector.extract_strided_slice %35 {offsets = [2, 0, 0], sizes = [2, 16, 8], strides = [1, 1, 1]} : vector<6x16x8xf32> to vector<2x16x8xf32>
    %40 = vector.extract_strided_slice %35 {offsets = [4, 0, 0], sizes = [2, 16, 8], strides = [1, 1, 1]} : vector<6x16x8xf32> to vector<2x16x8xf32>
    %41 = arith.truncf %40 : vector<2x16x8xf32> to vector<2x16x8xbf16>
    %42 = vector.extract_strided_slice %38 {offsets = [0, 0, 0], sizes = [2, 8, 8], strides = [1, 1, 1]} : vector<2x16x8xf32> to vector<2x8x8xf32>
    %43 = arith.truncf %42 : vector<2x8x8xf32> to vector<2x8x8xbf16>
    %44 = vector.extract_strided_slice %39 {offsets = [0, 0, 0], sizes = [2, 8, 8], strides = [1, 1, 1]} : vector<2x16x8xf32> to vector<2x8x8xf32>
    %45 = arith.truncf %44 : vector<2x8x8xf32> to vector<2x8x8xbf16>
    %46 = vector.extract_strided_slice %41 {offsets = [0, 0, 0], sizes = [2, 8, 8], strides = [1, 1, 1]} : vector<2x16x8xbf16> to vector<2x8x8xbf16>
    "tpu.trace_start"() <{level = 10 : i32, message = "hnd,hmd->hnm"}> : () -> ()
    %cst_18 = arith.constant dense<0.000000e+00> : vector<2x8x8xf32>
    %47 = tpu.matmul %43, %45, %cst_18 {dimension_numbers = #tpu.dot_dimension_numbers<[2], [2], [1], [1], [0, 0, 0, 1, 1, 1], [0], [0]>} : vector<2x8x8xbf16>, vector<2x8x8xbf16>, vector<2x8x8xf32> -> vector<2x8x8xf32>
    "tpu.trace_stop"() : () -> ()
    %cst_19 = arith.constant dense<0xFF800000> : vector<2x8xf32>
    %48 = vector.multi_reduction <maximumf>, %47, %cst_19 [2] : vector<2x8x8xf32> to vector<2x8xf32>
    %49 = vector.shape_cast %48 : vector<2x8xf32> to vector<2x8x1xf32>
    %50 = vector.broadcast %49 : vector<2x8x1xf32> to vector<2x8x8xf32>
    %51 = arith.subf %47, %50 : vector<2x8x8xf32>
    %52 = math.exp %51 : vector<2x8x8xf32>
    %cst_20 = arith.constant dense<0.000000e+00> : vector<2x8xf32>
    %53 = vector.multi_reduction <add>, %52, %cst_20 [2] : vector<2x8x8xf32> to vector<2x8xf32>
    %54 = vector.shape_cast %53 : vector<2x8xf32> to vector<2x8x1xf32>
    %55 = tpu.reciprocal %54 {approx = true} : vector<2x8x1xf32> -> vector<2x8x1xf32>
    %56 = vector.broadcast %55 : vector<2x8x1xf32> to vector<2x8x8xf32>
    %57 = arith.mulf %52, %56 : vector<2x8x8xf32>
    %58 = arith.truncf %57 : vector<2x8x8xf32> to vector<2x8x8xbf16>
    "tpu.trace_start"() <{level = 10 : i32, message = "hnm,hmd->hnd"}> : () -> ()
    %cst_21 = arith.constant dense<0.000000e+00> : vector<2x8x8xf32>
    %59 = tpu.matmul %58, %46, %cst_21 {dimension_numbers = #tpu.dot_dimension_numbers<[2], [1], [1], [2], [0, 0, 0, 1, 1, 2], [0], [0]>} : vector<2x8x8xbf16>, vector<2x8x8xbf16>, vector<2x8x8xf32> -> vector<2x8x8xf32>
    "tpu.trace_stop"() : () -> ()
    %60 = vector.extract_strided_slice %38 {offsets = [0, 8, 0], sizes = [2, 8, 8], strides = [1, 1, 1]} : vector<2x16x8xf32> to vector<2x8x8xf32>
    %61 = arith.truncf %60 : vector<2x8x8xf32> to vector<2x8x8xbf16>
    %62 = vector.extract_strided_slice %39 {offsets = [0, 8, 0], sizes = [2, 8, 8], strides = [1, 1, 1]} : vector<2x16x8xf32> to vector<2x8x8xf32>
    %63 = arith.truncf %62 : vector<2x8x8xf32> to vector<2x8x8xbf16>
    %64 = vector.extract_strided_slice %41 {offsets = [0, 8, 0], sizes = [2, 8, 8], strides = [1, 1, 1]} : vector<2x16x8xbf16> to vector<2x8x8xbf16>
    "tpu.trace_start"() <{level = 10 : i32, message = "hnd,hmd->hnm"}> : () -> ()
    %cst_22 = arith.constant dense<0.000000e+00> : vector<2x8x8xf32>
    %65 = tpu.matmul %61, %63, %cst_22 {dimension_numbers = #tpu.dot_dimension_numbers<[2], [2], [1], [1], [0, 0, 0, 1, 1, 1], [0], [0]>} : vector<2x8x8xbf16>, vector<2x8x8xbf16>, vector<2x8x8xf32> -> vector<2x8x8xf32>
    "tpu.trace_stop"() : () -> ()
    %cst_23 = arith.constant dense<0xFF800000> : vector<2x8xf32>
    %66 = vector.multi_reduction <maximumf>, %65, %cst_23 [2] : vector<2x8x8xf32> to vector<2x8xf32>
    %67 = vector.shape_cast %66 : vector<2x8xf32> to vector<2x8x1xf32>
    %68 = vector.broadcast %67 : vector<2x8x1xf32> to vector<2x8x8xf32>
    %69 = arith.subf %65, %68 : vector<2x8x8xf32>
    %70 = math.exp %69 : vector<2x8x8xf32>
    %cst_24 = arith.constant dense<0.000000e+00> : vector<2x8xf32>
    %71 = vector.multi_reduction <add>, %70, %cst_24 [2] : vector<2x8x8xf32> to vector<2x8xf32>
    %72 = vector.shape_cast %71 : vector<2x8xf32> to vector<2x8x1xf32>
    %73 = tpu.reciprocal %72 {approx = true} : vector<2x8x1xf32> -> vector<2x8x1xf32>
    %74 = vector.broadcast %73 : vector<2x8x1xf32> to vector<2x8x8xf32>
    %75 = arith.mulf %70, %74 : vector<2x8x8xf32>
    %76 = arith.truncf %75 : vector<2x8x8xf32> to vector<2x8x8xbf16>
    "tpu.trace_start"() <{level = 10 : i32, message = "hnm,hmd->hnd"}> : () -> ()
    %cst_25 = arith.constant dense<0.000000e+00> : vector<2x8x8xf32>
    %77 = tpu.matmul %76, %64, %cst_25 {dimension_numbers = #tpu.dot_dimension_numbers<[2], [1], [1], [2], [0, 0, 0, 1, 1, 2], [0], [0]>} : vector<2x8x8xbf16>, vector<2x8x8xbf16>, vector<2x8x8xf32> -> vector<2x8x8xf32>
    "tpu.trace_stop"() : () -> ()
    %78 = tpu.concatenate %59, %77 in 1 : vector<2x8x8xf32>, vector<2x8x8xf32> -> vector<2x16x8xf32>
    %c0_26 = arith.constant 0 : index
    %c0_27 = arith.constant 0 : index
    %c0_28 = arith.constant 0 : index
    %c0_29 = arith.constant 0 : index
    %79 = vector.load %arg6[%c0_26, %c0_27, %c0_28, %c0_29] : memref<1x2x8x32xbf16, #tpu.memory_space<vmem>>, vector<1x2x8x32xbf16>
    %80 = vector.shape_cast %79 : vector<1x2x8x32xbf16> to vector<2x8x32xbf16>
    %81 = vector.extract_strided_slice %78 {offsets = [0, 0, 0], sizes = [1, 16, 8], strides = [1, 1, 1]} : vector<2x16x8xf32> to vector<1x16x8xf32>
    %82 = vector.shape_cast %81 : vector<1x16x8xf32> to vector<16x8xf32>
    %83 = arith.truncf %82 : vector<16x8xf32> to vector<16x8xbf16>
    %84 = vector.extract_strided_slice %80 {offsets = [0, 0, 0], sizes = [1, 8, 32], strides = [1, 1, 1]} : vector<2x8x32xbf16> to vector<1x8x32xbf16>
    %85 = vector.shape_cast %84 : vector<1x8x32xbf16> to vector<8x32xbf16>
    %cst_30 = arith.constant dense<0.000000e+00> : vector<16x32xf32>
    %86 = tpu.matmul %83, %85, %cst_30 {dimension_numbers = #tpu.dot_dimension_numbers<[1], [0], [0], [1], [0, 0, 1, 1], [], []>} : vector<16x8xbf16>, vector<8x32xbf16>, vector<16x32xf32> -> vector<16x32xf32>
    %87 = vector.extract_strided_slice %78 {offsets = [1, 0, 0], sizes = [1, 16, 8], strides = [1, 1, 1]} : vector<2x16x8xf32> to vector<1x16x8xf32>
    %88 = vector.shape_cast %87 : vector<1x16x8xf32> to vector<16x8xf32>
    %89 = arith.truncf %88 : vector<16x8xf32> to vector<16x8xbf16>
    %90 = vector.extract_strided_slice %80 {offsets = [1, 0, 0], sizes = [1, 8, 32], strides = [1, 1, 1]} : vector<2x8x32xbf16> to vector<1x8x32xbf16>
    %91 = vector.shape_cast %90 : vector<1x8x32xbf16> to vector<8x32xbf16>
    %cst_31 = arith.constant dense<0.000000e+00> : vector<16x32xf32>
    %92 = tpu.matmul %89, %91, %cst_31 {dimension_numbers = #tpu.dot_dimension_numbers<[1], [0], [0], [1], [0, 0, 1, 1], [], []>} : vector<16x8xbf16>, vector<8x32xbf16>, vector<16x32xf32> -> vector<16x32xf32>
    %93 = arith.addf %86, %92 : vector<16x32xf32>
    %94 = arith.addf %3, %93 : vector<16x32xf32>
    %c0_32 = arith.constant 0 : index
    %c0_33 = arith.constant 0 : index
    %c0_34 = arith.constant 0 : index
    %95 = vector.load %arg7[%c0_32, %c0_33, %c0_34] : memref<1x1x32xf32, #tpu.memory_space<vmem>>, vector<1x1x32xf32>
    %96 = vector.shape_cast %95 : vector<1x1x32xf32> to vector<1x32xf32>
    %97 = vector.broadcast %96 : vector<1x32xf32> to vector<16x32xf32>
    %98 = arith.addf %94, %97 : vector<16x32xf32>
    %c0_35 = arith.constant 0 : index
    %c0_36 = arith.constant 0 : index
    %c0_37 = arith.constant 0 : index
    %99 = vector.load %arg8[%c0_35, %c0_36, %c0_37] : memref<1x1x32xf32, #tpu.memory_space<vmem>>, vector<1x1x32xf32>
    %100 = vector.shape_cast %99 : vector<1x1x32xf32> to vector<1x32xf32>
    %c0_38 = arith.constant 0 : index
    %c0_39 = arith.constant 0 : index
    %c0_40 = arith.constant 0 : index
    %101 = vector.load %arg9[%c0_38, %c0_39, %c0_40] : memref<1x1x32xf32, #tpu.memory_space<vmem>>, vector<1x1x32xf32>
    %102 = vector.shape_cast %101 : vector<1x1x32xf32> to vector<1x32xf32>
    %cst_41 = arith.constant dense<0.000000e+00> : vector<16xf32>
    %103 = vector.multi_reduction <add>, %98, %cst_41 [1] : vector<16x32xf32> to vector<16xf32>
    %104 = vector.shape_cast %103 : vector<16xf32> to vector<16x1xf32>
    %cst_42 = arith.constant 3.200000e+01 : f32
    %105 = vector.broadcast %cst_42 : f32 to vector<16x1xf32>
    %106 = arith.divf %104, %105 : vector<16x1xf32>
    %107 = arith.mulf %98, %98 : vector<16x32xf32>
    %cst_43 = arith.constant dense<0.000000e+00> : vector<16xf32>
    %108 = vector.multi_reduction <add>, %107, %cst_43 [1] : vector<16x32xf32> to vector<16xf32>
    %109 = vector.shape_cast %108 : vector<16xf32> to vector<16x1xf32>
    %cst_44 = arith.constant 3.200000e+01 : f32
    %110 = vector.broadcast %cst_44 : f32 to vector<16x1xf32>
    %111 = arith.divf %109, %110 : vector<16x1xf32>
    %112 = arith.mulf %106, %106 : vector<16x1xf32>
    %113 = arith.subf %111, %112 : vector<16x1xf32>
    %114 = vector.broadcast %106 : vector<16x1xf32> to vector<16x32xf32>
    %115 = arith.subf %98, %114 : vector<16x32xf32>
    %cst_45 = arith.constant 9.99999974E-6 : f32
    %116 = vector.broadcast %cst_45 : f32 to vector<16x1xf32>
    %117 = arith.addf %113, %116 : vector<16x1xf32>
    %118 = math.rsqrt %117 : vector<16x1xf32>
    %119 = vector.broadcast %118 : vector<16x1xf32> to vector<16x32xf32>
    %120 = arith.mulf %115, %119 : vector<16x32xf32>
    %121 = vector.broadcast %100 : vector<1x32xf32> to vector<16x32xf32>
    %122 = arith.mulf %120, %121 : vector<16x32xf32>
    %123 = vector.broadcast %102 : vector<1x32xf32> to vector<16x32xf32>
    %124 = arith.addf %122, %123 : vector<16x32xf32>
    %125 = arith.truncf %124 : vector<16x32xf32> to vector<16x32xbf16>
    %c0_46 = arith.constant 0 : index
    %c0_47 = arith.constant 0 : index
    %c0_48 = arith.constant 0 : index
    %126 = vector.load %arg10[%c0_46, %c0_47, %c0_48] : memref<1x32x64xbf16, #tpu.memory_space<vmem>>, vector<1x32x64xbf16>
    %127 = vector.shape_cast %126 : vector<1x32x64xbf16> to vector<32x64xbf16>
    %cst_49 = arith.constant dense<0.000000e+00> : vector<16x64xf32>
    %128 = tpu.matmul %125, %127, %cst_49 {dimension_numbers = #tpu.dot_dimension_numbers<[1], [0], [0], [1], [0, 0, 1, 1], [], []>} : vector<16x32xbf16>, vector<32x64xbf16>, vector<16x64xf32> -> vector<16x64xf32>
    %c0_50 = arith.constant 0 : index
    %c0_51 = arith.constant 0 : index
    %c0_52 = arith.constant 0 : index
    %129 = vector.load %arg11[%c0_50, %c0_51, %c0_52] : memref<1x1x64xf32, #tpu.memory_space<vmem>>, vector<1x1x64xf32>
    %130 = vector.shape_cast %129 : vector<1x1x64xf32> to vector<1x64xf32>
    %131 = vector.broadcast %130 : vector<1x64xf32> to vector<16x64xf32>
    %132 = arith.addf %128, %131 : vector<16x64xf32>
    %cst_53 = arith.constant 5.000000e-01 : f32
    %133 = vector.broadcast %cst_53 : f32 to vector<16x64xf32>
    %134 = arith.mulf %133, %132 : vector<16x64xf32>
    %cst_54 = arith.constant 0.707106769 : f32
    %135 = vector.broadcast %cst_54 : f32 to vector<16x64xf32>
    %136 = arith.mulf %132, %135 : vector<16x64xf32>
    %137 = math.erf %136 : vector<16x64xf32>
    %cst_55 = arith.constant 1.000000e+00 : f32
    %138 = vector.broadcast %cst_55 : f32 to vector<16x64xf32>
    %139 = arith.addf %138, %137 : vector<16x64xf32>
    %140 = arith.mulf %134, %139 : vector<16x64xf32>
    %141 = arith.truncf %140 : vector<16x64xf32> to vector<16x64xbf16>
    %c0_56 = arith.constant 0 : index
    %c0_57 = arith.constant 0 : index
    %c0_58 = arith.constant 0 : index
    %142 = vector.load %arg12[%c0_56, %c0_57, %c0_58] : memref<1x64x32xbf16, #tpu.memory_space<vmem>>, vector<1x64x32xbf16>
    %143 = vector.shape_cast %142 : vector<1x64x32xbf16> to vector<64x32xbf16>
    %cst_59 = arith.constant dense<0.000000e+00> : vector<16x32xf32>
    %144 = tpu.matmul %141, %143, %cst_59 {dimension_numbers = #tpu.dot_dimension_numbers<[1], [0], [0], [1], [0, 0, 1, 1], [], []>} : vector<16x64xbf16>, vector<64x32xbf16>, vector<16x32xf32> -> vector<16x32xf32>
    %c0_60 = arith.constant 0 : index
    %c0_61 = arith.constant 0 : index
    %c0_62 = arith.constant 0 : index
    %145 = vector.load %arg13[%c0_60, %c0_61, %c0_62] : memref<1x1x32xf32, #tpu.memory_space<vmem>>, vector<1x1x32xf32>
    %146 = vector.shape_cast %145 : vector<1x1x32xf32> to vector<1x32xf32>
    %147 = vector.broadcast %146 : vector<1x32xf32> to vector<16x32xf32>
    %148 = arith.addf %144, %147 : vector<16x32xf32>
    %149 = arith.addf %98, %148 : vector<16x32xf32>
    %c0_63 = arith.constant 0 : index
    %c0_64 = arith.constant 0 : index
    %150 = vector.load %arg15[%c0_63, %c0_64] : memref<16x32xf32, #tpu.memory_space<vmem>>, vector<16x32xf32>
    tpu.vector_store %arg15[%c0_63, %c0_64], %149 {strides = array<i32>} : memref<16x32xf32, #tpu.memory_space<vmem>>, vector<16x32xf32>,
    %c1_i32 = arith.constant 1 : i32
    %151 = arith.cmpi eq, %arg1, %c1_i32 : i32
    %152 = arith.extui %151 : i1 to i32
    %c0_i32_65 = arith.constant 0 : i32
    %153 = arith.cmpi ne, %152, %c0_i32_65 : i32
    scf.if %153 {
      %c0_66 = arith.constant 0 : index
      %c0_67 = arith.constant 0 : index
      %154 = vector.load %arg14[%c0_66, %c0_67] : memref<16x32xf32, #tpu.memory_space<vmem>>, vector<16x32xf32>
      tpu.vector_store %arg14[%c0_66, %c0_67], %149 {strides = array<i32>} : memref<16x32xf32, #tpu.memory_space<vmem>>, vector<16x32xf32>,
    } else {
    }
    return
  }
  func.func @transform_0(%arg0: i32, %arg1: i32) -> (i32, i32) {
    %c0_i32 = arith.constant 0 : i32
    %c0_i32_0 = arith.constant 0 : i32
    return %arg0, %c0_i32 : i32, i32
  }
  func.func @transform_1(%arg0: i32, %arg1: i32) -> (i32, i32, i32) {
    %c0_i32 = arith.constant 0 : i32
    %c0_i32_0 = arith.constant 0 : i32
    %c0_i32_1 = arith.constant 0 : i32
    return %arg1, %c0_i32, %c0_i32_0 : i32, i32, i32
  }
  func.func @transform_2(%arg0: i32, %arg1: i32) -> (i32, i32, i32) {
    %c0_i32 = arith.constant 0 : i32
    %c0_i32_0 = arith.constant 0 : i32
    %c0_i32_1 = arith.constant 0 : i32
    return %arg1, %c0_i32, %c0_i32_0 : i32, i32, i32
  }
  func.func @transform_3(%arg0: i32, %arg1: i32) -> (i32, i32, i32, i32) {
    %c0_i32 = arith.constant 0 : i32
    %c0_i32_0 = arith.constant 0 : i32
    %c0_i32_1 = arith.constant 0 : i32
    %c0_i32_2 = arith.constant 0 : i32
    return %arg1, %c0_i32, %c0_i32_0, %c0_i32_1 : i32, i32, i32, i32
  }
  func.func @transform_4(%arg0: i32, %arg1: i32) -> (i32, i32, i32, i32) {
    %c0_i32 = arith.constant 0 : i32
    %c0_i32_0 = arith.constant 0 : i32
    %c0_i32_1 = arith.constant 0 : i32
    %c0_i32_2 = arith.constant 0 : i32
    return %arg1, %c0_i32, %c0_i32_0, %c0_i32_1 : i32, i32, i32, i32
  }
  func.func @transform_5(%arg0: i32, %arg1: i32) -> (i32, i32, i32) {
    %c0_i32 = arith.constant 0 : i32
    %c0_i32_0 = arith.constant 0 : i32
    %c0_i32_1 = arith.constant 0 : i32
    return %arg1, %c0_i32, %c0_i32_0 : i32, i32, i32
  }
  func.func @transform_6(%arg0: i32, %arg1: i32) -> (i32, i32, i32) {
    %c0_i32 = arith.constant 0 : i32
    %c0_i32_0 = arith.constant 0 : i32
    %c0_i32_1 = arith.constant 0 : i32
    return %arg1, %c0_i32, %c0_i32_0 : i32, i32, i32
  }
  func.func @transform_7(%arg0: i32, %arg1: i32) -> (i32, i32, i32) {
    %c0_i32 = arith.constant 0 : i32
    %c0_i32_0 = arith.constant 0 : i32
    %c0_i32_1 = arith.constant 0 : i32
    return %arg1, %c0_i32, %c0_i32_0 : i32, i32, i32
  }
  func.func @transform_8(%arg0: i32, %arg1: i32) -> (i32, i32, i32) {
    %c0_i32 = arith.constant 0 : i32
    %c0_i32_0 = arith.constant 0 : i32
    %c0_i32_1 = arith.constant 0 : i32
    return %arg1, %c0_i32, %c0_i32_0 : i32, i32, i32
  }
  func.func @transform_9(%arg0: i32, %arg1: i32) -> (i32, i32, i32) {
    %c0_i32 = arith.constant 0 : i32
    %c0_i32_0 = arith.constant 0 : i32
    %c0_i32_1 = arith.constant 0 : i32
    return %arg1, %c0_i32, %c0_i32_0 : i32, i32, i32
  }
  func.func @transform_10(%arg0: i32, %arg1: i32) -> (i32, i32, i32) {
    %c0_i32 = arith.constant 0 : i32
    %c0_i32_0 = arith.constant 0 : i32
    %c0_i32_1 = arith.constant 0 : i32
    return %arg1, %c0_i32, %c0_i32_0 : i32, i32, i32
  }
  func.func @transform_11(%arg0: i32, %arg1: i32) -> (i32, i32, i32) {
    %c0_i32 = arith.constant 0 : i32
    %c0_i32_0 = arith.constant 0 : i32
    %c0_i32_1 = arith.constant 0 : i32
    return %arg1, %c0_i32, %c0_i32_0 : i32, i32, i32
  }
  func.func @transform_12(%arg0: i32, %arg1: i32) -> (i32, i32) {
    %c0_i32 = arith.constant 0 : i32
    %c0_i32_0 = arith.constant 0 : i32
    return %arg0, %c0_i32 : i32, i32
  }
}

</mosaic_0001>

<llo_original>
// kernel: tpu_custom_call.1
$region0: #{tpu_custom_call.1}
  #allocation0 [shape = 'u32[]', space=smem, size = 0x4, offset = 0x4, fixed_abs, tag = 'smem constant byte address 0x4 - core index']
  #allocation1 [shape = 'u32[72,128]{1,0:T(1,128)}', space=vmem, size = 0x9000, scoped, tag = 'internal scratch']
  #allocation2 [shape = 'f32[16,32]{1,0:T(8,128)}', space=vmem, size = 0x2000, scoped, tag = 'scratch operand']
  %s0 = inlined_call_operand.vmem [shape: f32[16,32], index: 0, kind: input, shape index: {}]
  %s1 = inlined_call_operand.vmem [shape: f32[2,1,32], index: 1, kind: input, shape index: {}]
  %s2 = inlined_call_operand.vmem [shape: f32[2,1,32], index: 2, kind: input, shape index: {}]
  %s3 = inlined_call_operand.vmem [shape: bf16[2,6,32,8], index: 3, kind: input, shape index: {}]
  %s4 = inlined_call_operand.vmem [shape: bf16[2,2,8,32], index: 4, kind: input, shape index: {}]
  %s5 = inlined_call_operand.vmem [shape: f32[2,1,32], index: 5, kind: input, shape index: {}]
  %s6 = inlined_call_operand.vmem [shape: f32[2,1,32], index: 6, kind: input, shape index: {}]
  %s7 = inlined_call_operand.vmem [shape: f32[2,1,32], index: 7, kind: input, shape index: {}]
  %s8 = inlined_call_operand.vmem [shape: bf16[2,32,64], index: 8, kind: input, shape index: {}]
  %s9 = inlined_call_operand.vmem [shape: f32[2,1,64], index: 9, kind: input, shape index: {}]
  %s10 = inlined_call_operand.vmem [shape: bf16[2,64,32], index: 10, kind: input, shape index: {}]
  %s11 = inlined_call_operand.vmem [shape: f32[2,1,32], index: 11, kind: input, shape index: {}]
  %s12 = inlined_call_operand.hbm [shape: f32[16,32], index: 12, kind: output, shape index: {}]
  %s13 = sld [smem:[#allocation0]]
  $region89: #{tpu_custom_call.1} parent=0
    _
  %s15 = ssub.s32 1, %s13
  %s16 = scalar_select 0, %s15, %s13
  $region1: #{tpu_custom_call.1} parent=0
    #allocation3 [shape = 'u8[8192]{0}', space=vmem, size = 0x2000, scoped, tag = 'output window, operand 0, single buffered']
    #allocation4 [shape = 's32[2]{0}', space=sflag, size = 0x8, scoped, tag = 'scoped memory for tpu_custom_call.1']
    %17 = vsyncpa [#allocation4], 0
    loop: start=0, step=1, limit=4
    $region2: #{tpu_custom_call.1} parent=1 // loop_pre_header
      _
    $region3: #{tpu_custom_call.1} parent=1 // loop_header
      %s19 = sphi 0, %s23
      %p20 = scmp.ge.s32.totalorder %s19, 4
      %s26 = sphi 0, %s38
      %s27 = sphi 0, %s34
      %s28 = sphi 0, %s26
      %s29 = sphi 0, %s27
      %s30 = sphi 0, %s28
      %s31 = sphi 0, %s29
      %s41 = sphi 0, %s43
      %s44 = sphi 0, %s41
      %s45 = sphi 0, %s44
      %s61 = sphi 0, %s45
      %s67 = sphi 0, %s69
      %s70 = sphi 0, %s67
      %s71 = sphi 0, %s70
      %s87 = sphi 0, %s71
      %s93 = sphi 0, %s95
      %s96 = sphi 0, %s93
      %s97 = sphi 0, %s96
      %s113 = sphi 0, %s97
      %s119 = sphi 0, %s121
      %s122 = sphi 0, %s119
      %s123 = sphi 0, %s122
      %s139 = sphi 0, %s123
      %s145 = sphi 0, %s147
      %s148 = sphi 0, %s145
      %s149 = sphi 0, %s148
      %s165 = sphi 0, %s149
      %s171 = sphi 0, %s173
      %s174 = sphi 0, %s171
      %s175 = sphi 0, %s174
      %s191 = sphi 0, %s175
      %s197 = sphi 0, %s199
      %s200 = sphi 0, %s197
      %s201 = sphi 0, %s200
      %s217 = sphi 0, %s201
      %s223 = sphi 0, %s225
      %s226 = sphi 0, %s223
      %s227 = sphi 0, %s226
      %s243 = sphi 0, %s227
      %s249 = sphi 0, %s251
      %s252 = sphi 0, %s249
      %s253 = sphi 0, %s252
      %s269 = sphi 0, %s253
      %s275 = sphi 0, %s277
      %s278 = sphi 0, %s275
      %s279 = sphi 0, %s278
      %s295 = sphi 0, %s279
      %s301 = sphi 0, %s303
      %s304 = sphi 0, %s301
      %s305 = sphi 0, %s304
      %s321 = sphi 0, %s305
      %s327 = sphi 0, %s329
      %s330 = sphi 0, %s327
      %s331 = sphi 0, %s330
      %s347 = sphi 0, %s331
      %s353 = sphi 0, %s355
      %s356 = sphi 0, %s353
      %s357 = sphi 0, %s356
      %s373 = sphi 0, %s357
    $region4: #{tpu_custom_call.1} parent=1 // loop_header_branch
      %22 = sbr.rel (%p20) target = $region8
    $region5: #{tpu_custom_call.1} parent=1 // loop_body
      %s24 = ssub.s32 %s19, 1
      %s25 = ssub.s32 %s19, 2
      %s32 = sadd.s32 1, %s27
      %p33 = scmp.ge.s32.totalorder %s32, 2
      %s34 = scalar_select %p33, 0, %s32
      %s35 = sadd.s32 1, %s26
      %s36 = scalar_select %p33, %s35, %s26
      %p37 = scmp.ge.s32.totalorder %s36, 1
      %s38 = scalar_select %p37, 0, %s36
      %s39 = ssub.s32 %s26, %s38
      %p40 = scmp.eq.s32.totalorder %s39, 0
      %s42 = sadd.s32 %s41, 1
      %s43 = scalar_select %p40, %s41, %s42
      %p46 = pneg %p40
      %p47 = scmp.eq.s32.totalorder %s19, 1
      %p48 = por %p46, %p47
      %p49 = scmp.ne.s32.totalorder %s41, %s44
      %p50 = scmp.eq.s32.totalorder %s19, 0
      %p51 = por %p49, %p50
      %p52 = scmp.ne.s32.totalorder %s41, %s44
      %p53 = scmp.eq.s32.totalorder %s24, 1
      %p54 = por %p52, %p53
      %p55 = scmp.ne.s32.totalorder %s44, %s45
      %p56 = scmp.eq.s32.totalorder %s24, 0
      %p57 = por %p55, %p56
      %p58 = scmp.ne.s32.totalorder %s44, %s45
      %p59 = scmp.eq.s32.totalorder %s25, 1
      %p60 = por %p58, %p59
      %p62 = scmp.ne.s32.totalorder %s45, %s61
      %p63 = scmp.eq.s32.totalorder %s25, 0
      %p64 = por %p62, %p63
      %s65 = ssub.s32 %s27, %s34
      %p66 = scmp.eq.s32.totalorder %s65, 0
      %s68 = sadd.s32 %s67, 1
      %s69 = scalar_select %p66, %s67, %s68
      %p72 = pneg %p66
      %p73 = scmp.eq.s32.totalorder %s19, 1
      %p74 = por %p72, %p73
      %p75 = scmp.ne.s32.totalorder %s67, %s70
      %p76 = scmp.eq.s32.totalorder %s19, 0
      %p77 = por %p75, %p76
      %p78 = scmp.ne.s32.totalorder %s67, %s70
      %p79 = scmp.eq.s32.totalorder %s24, 1
      %p80 = por %p78, %p79
      %p81 = scmp.ne.s32.totalorder %s70, %s71
      %p82 = scmp.eq.s32.totalorder %s24, 0
      %p83 = por %p81, %p82
      %p84 = scmp.ne.s32.totalorder %s70, %s71
      %p85 = scmp.eq.s32.totalorder %s25, 1
      %p86 = por %p84, %p85
      %p88 = scmp.ne.s32.totalorder %s71, %s87
      %p89 = scmp.eq.s32.totalorder %s25, 0
      %p90 = por %p88, %p89
      %s91 = ssub.s32 %s27, %s34
      %p92 = scmp.eq.s32.totalorder %s91, 0
      %s94 = sadd.s32 %s93, 1
      %s95 = scalar_select %p92, %s93, %s94
      %p98 = pneg %p92
      %p99 = scmp.eq.s32.totalorder %s19, 1
      %p100 = por %p98, %p99
      %p101 = scmp.ne.s32.totalorder %s93, %s96
      %p102 = scmp.eq.s32.totalorder %s19, 0
      %p103 = por %p101, %p102
      %p104 = scmp.ne.s32.totalorder %s93, %s96
      %p105 = scmp.eq.s32.totalorder %s24, 1
      %p106 = por %p104, %p105
      %p107 = scmp.ne.s32.totalorder %s96, %s97
      %p108 = scmp.eq.s32.totalorder %s24, 0
      %p109 = por %p107, %p108
      %p110 = scmp.ne.s32.totalorder %s96, %s97
      %p111 = scmp.eq.s32.totalorder %s25, 1
      %p112 = por %p110, %p111
      %p114 = scmp.ne.s32.totalorder %s97, %s113
      %p115 = scmp.eq.s32.totalorder %s25, 0
      %p116 = por %p114, %p115
      %s117 = ssub.s32 %s27, %s34
      %p118 = scmp.eq.s32.totalorder %s117, 0
      %s120 = sadd.s32 %s119, 1
      %s121 = scalar_select %p118, %s119, %s120
      %p124 = pneg %p118
      %p125 = scmp.eq.s32.totalorder %s19, 1
      %p126 = por %p124, %p125
      %p127 = scmp.ne.s32.totalorder %s119, %s122
      %p128 = scmp.eq.s32.totalorder %s19, 0
      %p129 = por %p127, %p128
      %p130 = scmp.ne.s32.totalorder %s119, %s122
      %p131 = scmp.eq.s32.totalorder %s24, 1
      %p132 = por %p130, %p131
      %p133 = scmp.ne.s32.totalorder %s122, %s123
      %p134 = scmp.eq.s32.totalorder %s24, 0
      %p135 = por %p133, %p134
      %p136 = scmp.ne.s32.totalorder %s122, %s123
      %p137 = scmp.eq.s32.totalorder %s25, 1
      %p138 = por %p136, %p137
      %p140 = scmp.ne.s32.totalorder %s123, %s139
      %p141 = scmp.eq.s32.totalorder %s25, 0
      %p142 = por %p140, %p141
      %s143 = ssub.s32 %s27, %s34
      %p144 = scmp.eq.s32.totalorder %s143, 0
      %s146 = sadd.s32 %s145, 1
      %s147 = scalar_select %p144, %s145, %s146
      %p150 = pneg %p144
      %p151 = scmp.eq.s32.totalorder %s19, 1
      %p152 = por %p150, %p151
      %p153 = scmp.ne.s32.totalorder %s145, %s148
      %p154 = scmp.eq.s32.totalorder %s19, 0
      %p155 = por %p153, %p154
      %p156 = scmp.ne.s32.totalorder %s145, %s148
      %p157 = scmp.eq.s32.totalorder %s24, 1
      %p158 = por %p156, %p157
      %p159 = scmp.ne.s32.totalorder %s148, %s149
      %p160 = scmp.eq.s32.totalorder %s24, 0
      %p161 = por %p159, %p160
      %p162 = scmp.ne.s32.totalorder %s148, %s149
      %p163 = scmp.eq.s32.totalorder %s25, 1
      %p164 = por %p162, %p163
      %p166 = scmp.ne.s32.totalorder %s149, %s165
      %p167 = scmp.eq.s32.totalorder %s25, 0
      %p168 = por %p166, %p167
      %s169 = ssub.s32 %s27, %s34
      %p170 = scmp.eq.s32.totalorder %s169, 0
      %s172 = sadd.s32 %s171, 1
      %s173 = scalar_select %p170, %s171, %s172
      %p176 = pneg %p170
      %p177 = scmp.eq.s32.totalorder %s19, 1
      %p178 = por %p176, %p177
      %p179 = scmp.ne.s32.totalorder %s171, %s174
      %p180 = scmp.eq.s32.totalorder %s19, 0
      %p181 = por %p179, %p180
      %p182 = scmp.ne.s32.totalorder %s171, %s174
      %p183 = scmp.eq.s32.totalorder %s24, 1
      %p184 = por %p182, %p183
      %p185 = scmp.ne.s32.totalorder %s174, %s175
      %p186 = scmp.eq.s32.totalorder %s24, 0
      %p187 = por %p185, %p186
      %p188 = scmp.ne.s32.totalorder %s174, %s175
      %p189 = scmp.eq.s32.totalorder %s25, 1
      %p190 = por %p188, %p189
      %p192 = scmp.ne.s32.totalorder %s175, %s191
      %p193 = scmp.eq.s32.totalorder %s25, 0
      %p194 = por %p192, %p193
      %s195 = ssub.s32 %s27, %s34
      %p196 = scmp.eq.s32.totalorder %s195, 0
      %s198 = sadd.s32 %s197, 1
      %s199 = scalar_select %p196, %s197, %s198
      %p202 = pneg %p196
      %p203 = scmp.eq.s32.totalorder %s19, 1
      %p204 = por %p202, %p203
      %p205 = scmp.ne.s32.totalorder %s197, %s200
      %p206 = scmp.eq.s32.totalorder %s19, 0
      %p207 = por %p205, %p206
      %p208 = scmp.ne.s32.totalorder %s197, %s200
      %p209 = scmp.eq.s32.totalorder %s24, 1
      %p210 = por %p208, %p209
      %p211 = scmp.ne.s32.totalorder %s200, %s201
      %p212 = scmp.eq.s32.totalorder %s24, 0
      %p213 = por %p211, %p212
      %p214 = scmp.ne.s32.totalorder %s200, %s201
      %p215 = scmp.eq.s32.totalorder %s25, 1
      %p216 = por %p214, %p215
      %p218 = scmp.ne.s32.totalorder %s201, %s217
      %p219 = scmp.eq.s32.totalorder %s25, 0
      %p220 = por %p218, %p219
      %s221 = ssub.s32 %s27, %s34
      %p222 = scmp.eq.s32.totalorder %s221, 0
      %s224 = sadd.s32 %s223, 1
      %s225 = scalar_select %p222, %s223, %s224
      %p228 = pneg %p222
      %p229 = scmp.eq.s32.totalorder %s19, 1
      %p230 = por %p228, %p229
      %p231 = scmp.ne.s32.totalorder %s223, %s226
      %p232 = scmp.eq.s32.totalorder %s19, 0
      %p233 = por %p231, %p232
      %p234 = scmp.ne.s32.totalorder %s223, %s226
      %p235 = scmp.eq.s32.totalorder %s24, 1
      %p236 = por %p234, %p235
      %p237 = scmp.ne.s32.totalorder %s226, %s227
      %p238 = scmp.eq.s32.totalorder %s24, 0
      %p239 = por %p237, %p238
      %p240 = scmp.ne.s32.totalorder %s226, %s227
      %p241 = scmp.eq.s32.totalorder %s25, 1
      %p242 = por %p240, %p241
      %p244 = scmp.ne.s32.totalorder %s227, %s243
      %p245 = scmp.eq.s32.totalorder %s25, 0
      %p246 = por %p244, %p245
      %s247 = ssub.s32 %s27, %s34
      %p248 = scmp.eq.s32.totalorder %s247, 0
      %s250 = sadd.s32 %s249, 1
      %s251 = scalar_select %p248, %s249, %s250
      %p254 = pneg %p248
      %p255 = scmp.eq.s32.totalorder %s19, 1
      %p256 = por %p254, %p255
      %p257 = scmp.ne.s32.totalorder %s249, %s252
      %p258 = scmp.eq.s32.totalorder %s19, 0
      %p259 = por %p257, %p258
      %p260 = scmp.ne.s32.totalorder %s249, %s252
      %p261 = scmp.eq.s32.totalorder %s24, 1
      %p262 = por %p260, %p261
      %p263 = scmp.ne.s32.totalorder %s252, %s253
      %p264 = scmp.eq.s32.totalorder %s24, 0
      %p265 = por %p263, %p264
      %p266 = scmp.ne.s32.totalorder %s252, %s253
      %p267 = scmp.eq.s32.totalorder %s25, 1
      %p268 = por %p266, %p267
      %p270 = scmp.ne.s32.totalorder %s253, %s269
      %p271 = scmp.eq.s32.totalorder %s25, 0
      %p272 = por %p270, %p271
      %s273 = ssub.s32 %s27, %s34
      %p274 = scmp.eq.s32.totalorder %s273, 0
      %s276 = sadd.s32 %s275, 1
      %s277 = scalar_select %p274, %s275, %s276
      %p280 = pneg %p274
      %p281 = scmp.eq.s32.totalorder %s19, 1
      %p282 = por %p280, %p281
      %p283 = scmp.ne.s32.totalorder %s275, %s278
      %p284 = scmp.eq.s32.totalorder %s19, 0
      %p285 = por %p283, %p284
      %p286 = scmp.ne.s32.totalorder %s275, %s278
      %p287 = scmp.eq.s32.totalorder %s24, 1
      %p288 = por %p286, %p287
      %p289 = scmp.ne.s32.totalorder %s278, %s279
      %p290 = scmp.eq.s32.totalorder %s24, 0
      %p291 = por %p289, %p290
      %p292 = scmp.ne.s32.totalorder %s278, %s279
      %p293 = scmp.eq.s32.totalorder %s25, 1
      %p294 = por %p292, %p293
      %p296 = scmp.ne.s32.totalorder %s279, %s295
      %p297 = scmp.eq.s32.totalorder %s25, 0
      %p298 = por %p296, %p297
      %s299 = ssub.s32 %s27, %s34
      %p300 = scmp.eq.s32.totalorder %s299, 0
      %s302 = sadd.s32 %s301, 1
      %s303 = scalar_select %p300, %s301, %s302
      %p306 = pneg %p300
      %p307 = scmp.eq.s32.totalorder %s19, 1
      %p308 = por %p306, %p307
      %p309 = scmp.ne.s32.totalorder %s301, %s304
      %p310 = scmp.eq.s32.totalorder %s19, 0
      %p311 = por %p309, %p310
      %p312 = scmp.ne.s32.totalorder %s301, %s304
      %p313 = scmp.eq.s32.totalorder %s24, 1
      %p314 = por %p312, %p313
      %p315 = scmp.ne.s32.totalorder %s304, %s305
      %p316 = scmp.eq.s32.totalorder %s24, 0
      %p317 = por %p315, %p316
      %p318 = scmp.ne.s32.totalorder %s304, %s305
      %p319 = scmp.eq.s32.totalorder %s25, 1
      %p320 = por %p318, %p319
      %p322 = scmp.ne.s32.totalorder %s305, %s321
      %p323 = scmp.eq.s32.totalorder %s25, 0
      %p324 = por %p322, %p323
      %s325 = ssub.s32 %s27, %s34
      %p326 = scmp.eq.s32.totalorder %s325, 0
      %s328 = sadd.s32 %s327, 1
      %s329 = scalar_select %p326, %s327, %s328
      %p332 = pneg %p326
      %p333 = scmp.eq.s32.totalorder %s19, 1
      %p334 = por %p332, %p333
      %p335 = scmp.ne.s32.totalorder %s327, %s330
      %p336 = scmp.eq.s32.totalorder %s19, 0
      %p337 = por %p335, %p336
      %p338 = scmp.ne.s32.totalorder %s327, %s330
      %p339 = scmp.eq.s32.totalorder %s24, 1
      %p340 = por %p338, %p339
      %p341 = scmp.ne.s32.totalorder %s330, %s331
      %p342 = scmp.eq.s32.totalorder %s24, 0
      %p343 = por %p341, %p342
      %p344 = scmp.ne.s32.totalorder %s330, %s331
      %p345 = scmp.eq.s32.totalorder %s25, 1
      %p346 = por %p344, %p345
      %p348 = scmp.ne.s32.totalorder %s331, %s347
      %p349 = scmp.eq.s32.totalorder %s25, 0
      %p350 = por %p348, %p349
      %s351 = ssub.s32 %s26, %s38
      %p352 = scmp.eq.s32.totalorder %s351, 0
      %s354 = sadd.s32 %s353, 1
      %s355 = scalar_select %p352, %s353, %s354
      %p358 = pneg %p352
      %p359 = scmp.eq.s32.totalorder %s19, 1
      %p360 = por %p358, %p359
      %p361 = scmp.ne.s32.totalorder %s353, %s356
      %p362 = scmp.eq.s32.totalorder %s19, 0
      %p363 = por %p361, %p362
      %p364 = scmp.ne.s32.totalorder %s353, %s356
      %p365 = scmp.eq.s32.totalorder %s24, 1
      %p366 = por %p364, %p365
      %p367 = scmp.ne.s32.totalorder %s356, %s357
      %p368 = scmp.eq.s32.totalorder %s24, 0
      %p369 = por %p367, %p368
      %p370 = scmp.ne.s32.totalorder %s356, %s357
      %p371 = scmp.eq.s32.totalorder %s25, 1
      %p372 = por %p370, %p371
      %p374 = scmp.ne.s32.totalorder %s357, %s373
      %p375 = scmp.eq.s32.totalorder %s25, 0
      %p376 = por %p374, %p375
      %p377 = scmp.le.s32.totalorder 1, %s19
      %p378 = scmp.lt.s32.totalorder %s19, 3
      %p379 = pnand %p377, %p378
      %p380 = pneg %p379
      // Predicated region
      $region9: #{tpu_custom_call.1} parent=5 // pred_check
        _
      $region10: #{tpu_custom_call.1} parent=5 // pred_check_branch
        %382 = sbr.rel (%p379) target = $region12
      $region11: #{tpu_custom_call.1} parent=5 // pred_region
        %s383 = ssub.s32 %s19, 1
        // Predicated region
        $region13: #{tpu_custom_call.1} parent=11 // pred_check
          %p384 = pneg %p57
        $region14: #{tpu_custom_call.1} parent=11 // pred_check_branch
          %386 = sbr.rel (%p384) target = $region16
        $region15: #{tpu_custom_call.1} parent=11 // pred_region
          %s387 = smul.u32 2, %s28
          %p388 = scmp.lt.s32.totalorder %s387, 1
          %s389 = scalar_select %p388, %s387, 1
          %s390 = smul.addr %s389, 8
          %s391 = scalar_lea.vmem %s0, %s390
          %s392 = smul.u32 2, %s28
        $region16: #{tpu_custom_call.1} parent=11 // pred_fallthru
          _
      $region12: #{tpu_custom_call.1} parent=5 // pred_fallthru
        _
      %p393 = scmp.lt.s32.totalorder %s19, 2
      // Predicated region
      $region17: #{tpu_custom_call.1} parent=5 // pred_check
        %p394 = pneg %p393
      $region18: #{tpu_custom_call.1} parent=5 // pred_check_branch
        %396 = sbr.rel (%p394) target = $region20
      $region19: #{tpu_custom_call.1} parent=5 // pred_region
        // Predicated region
        $region21: #{tpu_custom_call.1} parent=19 // pred_check
          %p397 = pneg %p77
        $region22: #{tpu_custom_call.1} parent=19 // pred_check_branch
          %399 = sbr.rel (%p397) target = $region24
        $region23: #{tpu_custom_call.1} parent=19 // pred_region
          %p400 = scmp.lt.s32.totalorder %s27, 1
          %s401 = scalar_select %p400, %s27, 1
          %s402 = scalar_lea.vmem %s1, %s401
        $region24: #{tpu_custom_call.1} parent=19 // pred_fallthru
          _
        // Predicated region
        $region25: #{tpu_custom_call.1} parent=19 // pred_check
          %p403 = pneg %p103
        $region26: #{tpu_custom_call.1} parent=19 // pred_check_branch
          %405 = sbr.rel (%p403) target = $region28
        $region27: #{tpu_custom_call.1} parent=19 // pred_region
          %p406 = scmp.lt.s32.totalorder %s27, 1
          %s407 = scalar_select %p406, %s27, 1
          %s408 = scalar_lea.vmem %s2, %s407
        $region28: #{tpu_custom_call.1} parent=19 // pred_fallthru
          _
        // Predicated region
        $region29: #{tpu_custom_call.1} parent=19 // pred_check
          %p409 = pneg %p129
        $region30: #{tpu_custom_call.1} parent=19 // pred_check_branch
          %411 = sbr.rel (%p409) target = $region32
        $region31: #{tpu_custom_call.1} parent=19 // pred_region
          %p412 = scmp.lt.s32.totalorder %s27, 1
          %s413 = scalar_select %p412, %s27, 1
          %s414 = smul.addr %s413, 24
          %s415 = smul.addr %s414, 4
          %s416 = scalar_lea.vmem %s3, %s415
        $region32: #{tpu_custom_call.1} parent=19 // pred_fallthru
          _
        // Predicated region
        $region33: #{tpu_custom_call.1} parent=19 // pred_check
          %p417 = pneg %p155
        $region34: #{tpu_custom_call.1} parent=19 // pred_check_branch
          %419 = sbr.rel (%p417) target = $region36
        $region35: #{tpu_custom_call.1} parent=19 // pred_region
          %p420 = scmp.lt.s32.totalorder %s27, 1
          %s421 = scalar_select %p420, %s27, 1
          %s422 = smul.addr %s421, 2
          %s423 = smul.addr %s422, 4
          %s424 = scalar_lea.vmem %s4, %s423
        $region36: #{tpu_custom_call.1} parent=19 // pred_fallthru
          _
        // Predicated region
        $region37: #{tpu_custom_call.1} parent=19 // pred_check
          %p425 = pneg %p181
        $region38: #{tpu_custom_call.1} parent=19 // pred_check_branch
          %427 = sbr.rel (%p425) target = $region40
        $region39: #{tpu_custom_call.1} parent=19 // pred_region
          %p428 = scmp.lt.s32.totalorder %s27, 1
          %s429 = scalar_select %p428, %s27, 1
          %s430 = scalar_lea.vmem %s5, %s429
        $region40: #{tpu_custom_call.1} parent=19 // pred_fallthru
          _
        // Predicated region
        $region41: #{tpu_custom_call.1} parent=19 // pred_check
          %p431 = pneg %p207
        $region42: #{tpu_custom_call.1} parent=19 // pred_check_branch
          %433 = sbr.rel (%p431) target = $region44
        $region43: #{tpu_custom_call.1} parent=19 // pred_region
          %p434 = scmp.lt.s32.totalorder %s27, 1
          %s435 = scalar_select %p434, %s27, 1
          %s436 = scalar_lea.vmem %s6, %s435
        $region44: #{tpu_custom_call.1} parent=19 // pred_fallthru
          _
        // Predicated region
        $region45: #{tpu_custom_call.1} parent=19 // pred_check
          %p437 = pneg %p233
        $region46: #{tpu_custom_call.1} parent=19 // pred_check_branch
          %439 = sbr.rel (%p437) target = $region48
        $region47: #{tpu_custom_call.1} parent=19 // pred_region
          %p440 = scmp.lt.s32.totalorder %s27, 1
          %s441 = scalar_select %p440, %s27, 1
          %s442 = scalar_lea.vmem %s7, %s441
        $region48: #{tpu_custom_call.1} parent=19 // pred_fallthru
          _
        // Predicated region
        $region49: #{tpu_custom_call.1} parent=19 // pred_check
          %p443 = pneg %p259
        $region50: #{tpu_custom_call.1} parent=19 // pred_check_branch
          %445 = sbr.rel (%p443) target = $region52
        $region51: #{tpu_custom_call.1} parent=19 // pred_region
          %p446 = scmp.lt.s32.totalorder %s27, 1
          %s447 = scalar_select %p446, %s27, 1
          %s448 = smul.addr %s447, 4
          %s449 = smul.addr %s448, 4
          %s450 = scalar_lea.vmem %s8, %s449
        $region52: #{tpu_custom_call.1} parent=19 // pred_fallthru
          _
        // Predicated region
        $region53: #{tpu_custom_call.1} parent=19 // pred_check
          %p451 = pneg %p285
        $region54: #{tpu_custom_call.1} parent=19 // pred_check_branch
          %453 = sbr.rel (%p451) target = $region56
        $region55: #{tpu_custom_call.1} parent=19 // pred_region
          %p454 = scmp.lt.s32.totalorder %s27, 1
          %s455 = scalar_select %p454, %s27, 1
          %s456 = scalar_lea.vmem %s9, %s455
        $region56: #{tpu_custom_call.1} parent=19 // pred_fallthru
          _
        // Predicated region
        $region57: #{tpu_custom_call.1} parent=19 // pred_check
          %p457 = pneg %p311
        $region58: #{tpu_custom_call.1} parent=19 // pred_check_branch
          %459 = sbr.rel (%p457) target = $region60
        $region59: #{tpu_custom_call.1} parent=19 // pred_region
          %p460 = scmp.lt.s32.totalorder %s27, 1
          %s461 = scalar_select %p460, %s27, 1
          %s462 = smul.addr %s461, 8
          %s463 = smul.addr %s462, 4
          %s464 = scalar_lea.vmem %s10, %s463
        $region60: #{tpu_custom_call.1} parent=19 // pred_fallthru
          _
        // Predicated region
        $region61: #{tpu_custom_call.1} parent=19 // pred_check
          %p465 = pneg %p337
        $region62: #{tpu_custom_call.1} parent=19 // pred_check_branch
          %467 = sbr.rel (%p465) target = $region64
        $region63: #{tpu_custom_call.1} parent=19 // pred_region
          %p468 = scmp.lt.s32.totalorder %s27, 1
          %s469 = scalar_select %p468, %s27, 1
          %s470 = scalar_lea.vmem %s11, %s469
        $region64: #{tpu_custom_call.1} parent=19 // pred_fallthru
          _
      $region20: #{tpu_custom_call.1} parent=5 // pred_fallthru
        _
      %p471 = scmp.le.s32.totalorder 1, %s19
      %p472 = scmp.lt.s32.totalorder %s19, 3
      %p473 = pnand %p471, %p472
      %p474 = pneg %p473
      // Predicated region
      $region65: #{tpu_custom_call.1} parent=5 // pred_check
        _
      $region66: #{tpu_custom_call.1} parent=5 // pred_check_branch
        %476 = sbr.rel (%p473) target = $region68
      $region67: #{tpu_custom_call.1} parent=5 // pred_region
        %s477 = ssub.s32 %s19, 1
        %s478 = smul.u32 2, %s28
        %p479 = scmp.lt.s32.totalorder %s478, 1
        %s480 = scalar_select %p479, %s478, 1
        %s481 = smul.addr %s480, 8
        %s482 = scalar_lea.vmem %s0, %s481
        %p483 = pneg %p57
        %p484 = pneg %p54
        %p485 = scmp.lt.s32.totalorder %s29, 1
        %s486 = scalar_select %p485, %s29, 1
        %s487 = scalar_lea.vmem %s1, %s486
        %p488 = pneg %p83
        %p489 = pneg %p80
        %p490 = scmp.lt.s32.totalorder %s29, 1
        %s491 = scalar_select %p490, %s29, 1
        %s492 = scalar_lea.vmem %s2, %s491
        %p493 = pneg %p109
        %p494 = pneg %p106
        %p495 = scmp.lt.s32.totalorder %s29, 1
        %s496 = scalar_select %p495, %s29, 1
        %s497 = smul.addr %s496, 24
        %s498 = smul.addr %s497, 4
        %s499 = scalar_lea.vmem %s3, %s498
        %p500 = pneg %p135
        %p501 = pneg %p132
        %p502 = scmp.lt.s32.totalorder %s29, 1
        %s503 = scalar_select %p502, %s29, 1
        %s504 = smul.addr %s503, 2
        %s505 = smul.addr %s504, 4
        %s506 = scalar_lea.vmem %s4, %s505
        %p507 = pneg %p161
        %p508 = pneg %p158
        %p509 = scmp.lt.s32.totalorder %s29, 1
        %s510 = scalar_select %p509, %s29, 1
        %s511 = scalar_lea.vmem %s5, %s510
        %p512 = pneg %p187
        %p513 = pneg %p184
        %p514 = scmp.lt.s32.totalorder %s29, 1
        %s515 = scalar_select %p514, %s29, 1
        %s516 = scalar_lea.vmem %s6, %s515
        %p517 = pneg %p213
        %p518 = pneg %p210
        %p519 = scmp.lt.s32.totalorder %s29, 1
        %s520 = scalar_select %p519, %s29, 1
        %s521 = scalar_lea.vmem %s7, %s520
        %p522 = pneg %p239
        %p523 = pneg %p236
        %p524 = scmp.lt.s32.totalorder %s29, 1
        %s525 = scalar_select %p524, %s29, 1
        %s526 = smul.addr %s525, 4
        %s527 = smul.addr %s526, 4
        %s528 = scalar_lea.vmem %s8, %s527
        %p529 = pneg %p265
        %p530 = pneg %p262
        %p531 = scmp.lt.s32.totalorder %s29, 1
        %s532 = scalar_select %p531, %s29, 1
        %s533 = scalar_lea.vmem %s9, %s532
        %p534 = pneg %p291
        %p535 = pneg %p288
        %p536 = scmp.lt.s32.totalorder %s29, 1
        %s537 = scalar_select %p536, %s29, 1
        %s538 = smul.addr %s537, 8
        %s539 = smul.addr %s538, 4
        %s540 = scalar_lea.vmem %s10, %s539
        %p541 = pneg %p317
        %p542 = pneg %p314
        %p543 = scmp.lt.s32.totalorder %s29, 1
        %s544 = scalar_select %p543, %s29, 1
        %s545 = scalar_lea.vmem %s11, %s544
        %p546 = pneg %p343
        %p547 = pneg %p340
        %p548 = pneg %p369
        %p549 = pneg %p366
        %s550 = smul.u32 2, %s28
        %p551 = scmp.lt.s32.totalorder %s550, 1
        %s552 = scalar_select %p551, %s550, 1
        %s553 = smul.addr %s552, 8
        %s554 = scalar_lea.vmem %s0, %s553
        %s555 = smul.u32 2, %s28
        %p556 = scmp.lt.s32.totalorder %s29, 1
        %s557 = scalar_select %p556, %s29, 1
        %s558 = scalar_lea.vmem %s1, %s557
        %p559 = scmp.lt.s32.totalorder %s29, 1
        %s560 = scalar_select %p559, %s29, 1
        %s561 = scalar_lea.vmem %s2, %s560
        %p562 = scmp.lt.s32.totalorder %s29, 1
        %s563 = scalar_select %p562, %s29, 1
        %s564 = smul.addr %s563, 24
        %s565 = smul.addr %s564, 4
        %s566 = scalar_lea.vmem %s3, %s565
        %p567 = scmp.lt.s32.totalorder %s29, 1
        %s568 = scalar_select %p567, %s29, 1
        %s569 = smul.addr %s568, 2
        %s570 = smul.addr %s569, 4
        %s571 = scalar_lea.vmem %s4, %s570
        %p572 = scmp.lt.s32.totalorder %s29, 1
        %s573 = scalar_select %p572, %s29, 1
        %s574 = scalar_lea.vmem %s5, %s573
        %p575 = scmp.lt.s32.totalorder %s29, 1
        %s576 = scalar_select %p575, %s29, 1
        %s577 = scalar_lea.vmem %s6, %s576
        %p578 = scmp.lt.s32.totalorder %s29, 1
        %s579 = scalar_select %p578, %s29, 1
        %s580 = scalar_lea.vmem %s7, %s579
        %p581 = scmp.lt.s32.totalorder %s29, 1
        %s582 = scalar_select %p581, %s29, 1
        %s583 = smul.addr %s582, 4
        %s584 = smul.addr %s583, 4
        %s585 = scalar_lea.vmem %s8, %s584
        %p586 = scmp.lt.s32.totalorder %s29, 1
        %s587 = scalar_select %p586, %s29, 1
        %s588 = scalar_lea.vmem %s9, %s587
        %p589 = scmp.lt.s32.totalorder %s29, 1
        %s590 = scalar_select %p589, %s29, 1
        %s591 = smul.addr %s590, 8
        %s592 = smul.addr %s591, 4
        %s593 = scalar_lea.vmem %s10, %s592
        %p594 = scmp.lt.s32.totalorder %s29, 1
        %s595 = scalar_select %p594, %s29, 1
        %s596 = scalar_lea.vmem %s11, %s595
        %s597 = smul.u32 2, %s28
        %p599 = scmp.eq.s32.totalorder %s29, 0
        // Predicated region
        $region69: #{tpu_custom_call.1} parent=67 // pred_check
          %p600 = pneg %p599
        $region70: #{tpu_custom_call.1} parent=67 // pred_check_branch
          %602 = sbr.rel (%p600) target = $region72
        $region71: #{tpu_custom_call.1} parent=67 // pred_region
          %v603 = vld [vmem:[%s554] sm:$0xff]
          %v604 = vld [vmem:[%s554 + $0x8] sm:$0xff]
          %vm605 = vcmask 261120
          %606 = vst.msk [vmem:[#allocation2] sm:$0xff] %vm605, %v603
          %607 = vst.msk [vmem:[#allocation2 + $0x8] sm:$0xff] %vm605, %v604
        $region72: #{tpu_custom_call.1} parent=67 // pred_fallthru
          _
        %v608 = vld [vmem:[#allocation2] sm:$0xff]
        %v609 = vld [vmem:[#allocation2 + $0x8] sm:$0xff]
        %v610 = vld [vmem:[%s558] sm:$0x1]
        %v611 = vld [vmem:[%s561] sm:$0x1]
        %vm612 = vcmask 261120
        %v613 = vsel %vm612, %v608, 0.0
        %614 = vadd.xlane.f32.xlu0 %v613
        %v615 = vpop.xlane.xlu0 %614
        %v616 = vsel %vm612, %v609, 0.0
        %617 = vadd.xlane.f32.xlu0 %v616
        %v618 = vpop.xlane.xlu0 %617
        %v619 = vrcp.pop 32.0
        %v620 = vmul.f32 32.0, %v619
        %v621 = vsub.f32 1.0, %v620
        %v622 = vmul.f32 %v619, %v621
        %v623 = vadd.f32 %v619, %v622
        %vm624 = vweird.f32 %v619
        %v625 = vsel %vm624, %v619, %v623
        %v626 = vmul.f32 %v615, %v625
        %v627 = vmul.f32 %v618, %v625
        %v628 = vmul.f32 %v608, %v608
        %v629 = vmul.f32 %v609, %v609
        %v630 = vsel %vm612, %v628, 0.0
        %631 = vadd.xlane.f32.xlu0 %v630
        %v632 = vpop.xlane.xlu0 %631
        %v633 = vsel %vm612, %v629, 0.0
        %634 = vadd.xlane.f32.xlu0 %v633
        %v635 = vpop.xlane.xlu0 %634
        %v636 = vmul.f32 %v632, %v625
        %v637 = vmul.f32 %v635, %v625
        %v638 = vmul.f32 %v626, %v626
        %v639 = vmul.f32 %v627, %v627
        %v640 = vsub.f32 %v636, %v638
        %v641 = vsub.f32 %v637, %v639
        %v642 = vsub.f32 %v608, %v626
        %v643 = vsub.f32 %v609, %v627
        %v644 = vadd.f32 %v640, 1e-05
        %v645 = vadd.f32 %v641, 1e-05
        %v646 = vrsqrt.pop %v644
        %v647 = vmul.f32 %v646, %v644
        %v648 = vmul.f32 %v647, %v646
        %v649 = vmul.f32 0.5, %v648
        %v650 = vsub.f32 1.5, %v649
        %v651 = vmul.f32 %v646, %v650
        %vm652 = vweird.f32 %v644
        %vm653 = vweird.f32 %v646
        %vm654 = vmor %vm652, %vm653
        %v655 = vsel %vm654, %v646, %v651
        %v656 = vrsqrt.pop %v645
        %v657 = vmul.f32 %v656, %v645
        %v658 = vmul.f32 %v657, %v656
        %v659 = vmul.f32 0.5, %v658
        %v660 = vsub.f32 1.5, %v659
        %v661 = vmul.f32 %v656, %v660
        %vm662 = vweird.f32 %v645
        %vm663 = vweird.f32 %v656
        %vm664 = vmor %vm662, %vm663
        %v665 = vsel %vm664, %v656, %v661
        %v666 = vmul.f32 %v642, %v655
        %v667 = vmul.f32 %v643, %v665
        %v669 = vperm.slane %v610, 0
        %v671 = vmul.f32 %v666, %v669
        %v672 = vmul.f32 %v667, %v669
        %v674 = vperm.slane %v611, 0
        %v676 = vadd.f32 %v671, %v674
        %v677 = vadd.f32 %v672, %v674
        %v678 = vpack.c.bf16 %v676, %v676
        %v679 = vpack.c.bf16 %v677, %v677
        %v680 = vld [vmem:[%s566] sm:$0xf]
        %v681 = vld [vmem:[%s566 + $0x4] sm:$0xf]
        %v682 = vld [vmem:[%s566 + $0x8] sm:$0xf]
        %v683 = vld [vmem:[%s566 + $0xc] sm:$0xf]
        %v684 = vld [vmem:[%s566 + $0x10] sm:$0xf]
        %v685 = vld [vmem:[%s566 + $0x14] sm:$0xf]
        %v686 = vld [vmem:[%s566 + $0x18] sm:$0xf]
        %v687 = vld [vmem:[%s566 + $0x1c] sm:$0xf]
        %v688 = vld [vmem:[%s566 + $0x20] sm:$0xf]
        %v689 = vld [vmem:[%s566 + $0x24] sm:$0xf]
        %v690 = vld [vmem:[%s566 + $0x28] sm:$0xf]
        %v691 = vld [vmem:[%s566 + $0x2c] sm:$0xf]
        %v692 = vld [vmem:[%s566 + $0x30] sm:$0xf]
        %v693 = vld [vmem:[%s566 + $0x34] sm:$0xf]
        %v694 = vld [vmem:[%s566 + $0x38] sm:$0xf]
        %v695 = vld [vmem:[%s566 + $0x3c] sm:$0xf]
        %v696 = vld [vmem:[%s566 + $0x40] sm:$0xf]
        %v697 = vld [vmem:[%s566 + $0x44] sm:$0xf]
        %v698 = vld [vmem:[%s566 + $0x48] sm:$0xf]
        %v699 = vld [vmem:[%s566 + $0x4c] sm:$0xf]
        %v700 = vld [vmem:[%s566 + $0x50] sm:$0xf]
        %v701 = vld [vmem:[%s566 + $0x54] sm:$0xf]
        %v702 = vld [vmem:[%s566 + $0x58] sm:$0xf]
        %v703 = vld [vmem:[%s566 + $0x5c] sm:$0xf]
        %v706 = vunpack.c.l.b16 %v678
        %v707 = vunpack.c.l.b16 %v679
        %v708 = vpack.c.b16 %v707, %v706
        %v713 = vunpack.c.l.b16 %v680
        %v714 = vunpack.c.l.b16 %v681
        %v715 = vunpack.c.l.b16 %v682
        %v716 = vunpack.c.l.b16 %v683
        %v717 = vpack.c.b16 %v714, %v713
        %v718 = vpack.c.b16 %v716, %v715
        %v722 = vsel %vm612, %v708, 0
        %724 = vmatpush.bf16.msra.mxu0 0
        %725 = vmatpush.bf16.msra.mxu0 0
        %726 = vmatpush.bf16.msra.mxu0 0
        %727 = vmatpush.bf16.msra.mxu0 0
        %728 = vmatpush.bf16.msra.mxu0 0
        %729 = vmatpush.bf16.msra.mxu0 0
        %730 = vmatpush.bf16.msra.mxu0 %v718
        %731 = vmatpush.bf16.msra.mxu0 %v717
        %732 = vmatmul.bf16.gmra.mxu0 %v722
        %v733 = vpop.f32.mrf.mxu0
        %v734 = vadd.f32 0.0, %v733
        %v735 = vpop.f32.mrf.mxu0
        %v736 = vadd.f32 0.0, %v735
        %737 = vdwg.mxu0
        %v742 = vunpack.c.l.b16 %v684
        %v743 = vunpack.c.l.b16 %v685
        %v744 = vunpack.c.l.b16 %v686
        %v745 = vunpack.c.l.b16 %v687
        %v746 = vpack.c.b16 %v743, %v742
        %v747 = vpack.c.b16 %v745, %v744
        %750 = vmatpush.bf16.msra.mxu0 0
        %751 = vmatpush.bf16.msra.mxu0 0
        %752 = vmatpush.bf16.msra.mxu0 0
        %753 = vmatpush.bf16.msra.mxu0 0
        %754 = vmatpush.bf16.msra.mxu0 0
        %755 = vmatpush.bf16.msra.mxu0 0
        %756 = vmatpush.bf16.msra.mxu0 %v747
        %757 = vmatpush.bf16.msra.mxu0 %v746
        %758 = vmatmul.bf16.gmra.mxu0 %v722
        %v759 = vpop.f32.mrf.mxu0
        %v760 = vadd.f32 0.0, %v759
        %v761 = vpop.f32.mrf.mxu0
        %v762 = vadd.f32 0.0, %v761
        %763 = vdwg.mxu0
        %v768 = vunpack.c.l.b16 %v688
        %v769 = vunpack.c.l.b16 %v689
        %v770 = vunpack.c.l.b16 %v690
        %v771 = vunpack.c.l.b16 %v691
        %v772 = vpack.c.b16 %v769, %v768
        %v773 = vpack.c.b16 %v771, %v770
        %776 = vmatpush.bf16.msra.mxu0 0
        %777 = vmatpush.bf16.msra.mxu0 0
        %778 = vmatpush.bf16.msra.mxu0 0
        %779 = vmatpush.bf16.msra.mxu0 0
        %780 = vmatpush.bf16.msra.mxu0 0
        %781 = vmatpush.bf16.msra.mxu0 0
        %782 = vmatpush.bf16.msra.mxu0 %v773
        %783 = vmatpush.bf16.msra.mxu0 %v772
        %784 = vmatmul.bf16.gmra.mxu0 %v722
        %v785 = vpop.f32.mrf.mxu0
        %v786 = vadd.f32 0.0, %v785
        %v787 = vpop.f32.mrf.mxu0
        %v788 = vadd.f32 0.0, %v787
        %789 = vdwg.mxu0
        %v794 = vunpack.c.l.b16 %v692
        %v795 = vunpack.c.l.b16 %v693
        %v796 = vunpack.c.l.b16 %v694
        %v797 = vunpack.c.l.b16 %v695
        %v798 = vpack.c.b16 %v795, %v794
        %v799 = vpack.c.b16 %v797, %v796
        %802 = vmatpush.bf16.msra.mxu0 0
        %803 = vmatpush.bf16.msra.mxu0 0
        %804 = vmatpush.bf16.msra.mxu0 0
        %805 = vmatpush.bf16.msra.mxu0 0
        %806 = vmatpush.bf16.msra.mxu0 0
        %807 = vmatpush.bf16.msra.mxu0 0
        %808 = vmatpush.bf16.msra.mxu0 %v799
        %809 = vmatpush.bf16.msra.mxu0 %v798
        %810 = vmatmul.bf16.gmra.mxu0 %v722
        %v811 = vpop.f32.mrf.mxu0
        %v812 = vadd.f32 0.0, %v811
        %v813 = vpop.f32.mrf.mxu0
        %v814 = vadd.f32 0.0, %v813
        %815 = vdwg.mxu0
        %v820 = vunpack.c.l.b16 %v696
        %v821 = vunpack.c.l.b16 %v697
        %v822 = vunpack.c.l.b16 %v698
        %v823 = vunpack.c.l.b16 %v699
        %v824 = vpack.c.b16 %v821, %v820
        %v825 = vpack.c.b16 %v823, %v822
        %828 = vmatpush.bf16.msra.mxu0 0
        %829 = vmatpush.bf16.msra.mxu0 0
        %830 = vmatpush.bf16.msra.mxu0 0
        %831 = vmatpush.bf16.msra.mxu0 0
        %832 = vmatpush.bf16.msra.mxu0 0
        %833 = vmatpush.bf16.msra.mxu0 0
        %834 = vmatpush.bf16.msra.mxu0 %v825
        %835 = vmatpush.bf16.msra.mxu0 %v824
        %836 = vmatmul.bf16.gmra.mxu0 %v722
        %v837 = vpop.f32.mrf.mxu0
        %v838 = vadd.f32 0.0, %v837
        %v839 = vpop.f32.mrf.mxu0
        %v840 = vadd.f32 0.0, %v839
        %841 = vdwg.mxu0
        %v846 = vunpack.c.l.b16 %v700
        %v847 = vunpack.c.l.b16 %v701
        %v848 = vunpack.c.l.b16 %v702
        %v849 = vunpack.c.l.b16 %v703
        %v850 = vpack.c.b16 %v847, %v846
        %v851 = vpack.c.b16 %v849, %v848
        %854 = vmatpush.bf16.msra.mxu0 0
        %855 = vmatpush.bf16.msra.mxu0 0
        %856 = vmatpush.bf16.msra.mxu0 0
        %857 = vmatpush.bf16.msra.mxu0 0
        %858 = vmatpush.bf16.msra.mxu0 0
        %859 = vmatpush.bf16.msra.mxu0 0
        %860 = vmatpush.bf16.msra.mxu0 %v851
        %861 = vmatpush.bf16.msra.mxu0 %v850
        %862 = vmatmul.bf16.gmra.mxu0 %v722
        %v863 = vpop.f32.mrf.mxu0
        %v864 = vadd.f32 0.0, %v863
        %v865 = vpop.f32.mrf.mxu0
        %v866 = vadd.f32 0.0, %v865
        %867 = vdwg.mxu0
        %v868 = vmul.f32 %v734, 0.35355338
        %v869 = vmul.f32 %v736, 0.35355338
        %v870 = vmul.f32 %v760, 0.35355338
        %v871 = vmul.f32 %v762, 0.35355338
        %v872 = vpack.c.bf16 %v838, %v838
        %v873 = vpack.c.bf16 %v840, %v840
        %v874 = vpack.c.bf16 %v864, %v864
        %v875 = vpack.c.bf16 %v866, %v866
        %v876 = vpack.c.bf16 %v868, %v868
        %v877 = vpack.c.bf16 %v870, %v870
        %v878 = vpack.c.bf16 %v786, %v786
        %v879 = vpack.c.bf16 %v812, %v812
        %vm880 = vcmask 64512
        %v882 = vsel %vm880, %v876, 0
        %v885 = vsel %vm880, %v878, 0
        %887 = vmatpush.bf16.xpose.msra.mxu0 0
        %888 = vmatpush.bf16.xpose.msra.mxu0 0
        %889 = vmatpush.bf16.xpose.msra.mxu0 0
        %890 = vmatpush.bf16.xpose.msra.mxu0 0
        %891 = vmatpush.bf16.xpose.msra.mxu0 0
        %892 = vmatpush.bf16.xpose.msra.mxu0 0
        %893 = vmatpush.bf16.xpose.msra.mxu0 0
        %894 = vmatpush.bf16.xpose.msra.mxu0 %v885
        %895 = vmatmul.bf16.gmra.mxu0 %v882
        %v896 = vpop.f32.mrf.mxu0
        %v897 = vadd.f32 0.0, %v896
        %v898 = vpop.f32.mrf.mxu0
        %899 = vdwg.mxu0
        %v901 = vsel %vm880, %v877, 0
        %v904 = vsel %vm880, %v879, 0
        %906 = vmatpush.bf16.xpose.msra.mxu0 0
        %907 = vmatpush.bf16.xpose.msra.mxu0 0
        %908 = vmatpush.bf16.xpose.msra.mxu0 0
        %909 = vmatpush.bf16.xpose.msra.mxu0 0
        %910 = vmatpush.bf16.xpose.msra.mxu0 0
        %911 = vmatpush.bf16.xpose.msra.mxu0 0
        %912 = vmatpush.bf16.xpose.msra.mxu0 0
        %913 = vmatpush.bf16.xpose.msra.mxu0 %v904
        %914 = vmatmul.bf16.gmra.mxu0 %v901
        %v915 = vpop.f32.mrf.mxu0
        %v916 = vadd.f32 0.0, %v915
        %v917 = vpop.f32.mrf.mxu0
        %918 = vdwg.mxu0
        %v919 = vsel %vm880, %v897, -inf
        %920 = vmax.xlane.f32.xlu0 %v919
        %v921 = vpop.xlane.xlu0 %920
        %v922 = vsel %vm880, %v916, -inf
        %923 = vmax.xlane.f32.xlu0 %v922
        %v924 = vpop.xlane.xlu0 %923
        %v925 = vsub.f32 %v897, %v921
        %v926 = vsub.f32 %v916, %v924
        %v927 = vmul.f32 %v925, 1.442695
        %v928 = vpow.pop %v927
        %v929 = vmul.f32 %v926, 1.442695
        %v930 = vpow.pop %v929
        %v931 = vsel %vm880, %v928, 0.0
        %932 = vadd.xlane.f32.xlu0 %v931
        %v933 = vpop.xlane.xlu0 %932
        %v934 = vsel %vm880, %v930, 0.0
        %935 = vadd.xlane.f32.xlu0 %v934
        %v936 = vpop.xlane.xlu0 %935
        %v937 = vrcp.pop %v933
        %v938 = vrcp.pop %v936
        %v939 = vmul.f32 %v928, %v937
        %v940 = vmul.f32 %v930, %v938
        %v941 = vpack.c.bf16 %v939, %v939
        %v942 = vpack.c.bf16 %v940, %v940
        %v944 = vsel %vm880, %v941, 0
        %vm946 = vcmask 1043456
        %v948 = vsel %vm946, %v872, 0
        %950 = vmatpush.bf16.msra.mxu0 0
        %951 = vmatpush.bf16.msra.mxu0 0
        %952 = vmatpush.bf16.msra.mxu0 0
        %953 = vmatpush.bf16.msra.mxu0 0
        %954 = vmatpush.bf16.msra.mxu0 0
        %955 = vmatpush.bf16.msra.mxu0 0
        %956 = vmatpush.bf16.msra.mxu0 0
        %957 = vmatpush.bf16.msra.mxu0 %v948
        %958 = vmatmul.bf16.gmra.mxu0 %v944
        %v959 = vpop.f32.mrf.mxu0
        %v960 = vadd.f32 0.0, %v959
        %v961 = vpop.f32.mrf.mxu0
        %962 = vdwg.mxu0
        %v964 = vsel %vm880, %v942, 0
        %v967 = vsel %vm946, %v874, 0
        %969 = vmatpush.bf16.msra.mxu0 0
        %970 = vmatpush.bf16.msra.mxu0 0
        %971 = vmatpush.bf16.msra.mxu0 0
        %972 = vmatpush.bf16.msra.mxu0 0
        %973 = vmatpush.bf16.msra.mxu0 0
        %974 = vmatpush.bf16.msra.mxu0 0
        %975 = vmatpush.bf16.msra.mxu0 0
        %976 = vmatpush.bf16.msra.mxu0 %v967
        %977 = vmatmul.bf16.gmra.mxu0 %v964
        %v978 = vpop.f32.mrf.mxu0
        %v979 = vadd.f32 0.0, %v978
        %v980 = vpop.f32.mrf.mxu0
        %981 = vdwg.mxu0
        %v982 = vpack.c.bf16 %v869, %v869
        %v983 = vpack.c.bf16 %v871, %v871
        %v984 = vpack.c.bf16 %v788, %v788
        %v985 = vpack.c.bf16 %v814, %v814
        %v987 = vsel %vm880, %v982, 0
        %v990 = vsel %vm880, %v984, 0
        %992 = vmatpush.bf16.xpose.msra.mxu0 0
        %993 = vmatpush.bf16.xpose.msra.mxu0 0
        %994 = vmatpush.bf16.xpose.msra.mxu0 0
        %995 = vmatpush.bf16.xpose.msra.mxu0 0
        %996 = vmatpush.bf16.xpose.msra.mxu0 0
        %997 = vmatpush.bf16.xpose.msra.mxu0 0
        %998 = vmatpush.bf16.xpose.msra.mxu0 0
        %999 = vmatpush.bf16.xpose.msra.mxu0 %v990
        %1000 = vmatmul.bf16.gmra.mxu0 %v987
        %v1001 = vpop.f32.mrf.mxu0
        %v1002 = vadd.f32 0.0, %v1001
        %v1003 = vpop.f32.mrf.mxu0
        %1004 = vdwg.mxu0
        %v1006 = vsel %vm880, %v983, 0
        %v1009 = vsel %vm880, %v985, 0
        %1011 = vmatpush.bf16.xpose.msra.mxu0 0
        %1012 = vmatpush.bf16.xpose.msra.mxu0 0
        %1013 = vmatpush.bf16.xpose.msra.mxu0 0
        %1014 = vmatpush.bf16.xpose.msra.mxu0 0
        %1015 = vmatpush.bf16.xpose.msra.mxu0 0
        %1016 = vmatpush.bf16.xpose.msra.mxu0 0
        %1017 = vmatpush.bf16.xpose.msra.mxu0 0
        %1018 = vmatpush.bf16.xpose.msra.mxu0 %v1009
        %1019 = vmatmul.bf16.gmra.mxu0 %v1006
        %v1020 = vpop.f32.mrf.mxu0
        %v1021 = vadd.f32 0.0, %v1020
        %v1022 = vpop.f32.mrf.mxu0
        %1023 = vdwg.mxu0
        %v1024 = vsel %vm880, %v1002, -inf
        %1025 = vmax.xlane.f32.xlu0 %v1024
        %v1026 = vpop.xlane.xlu0 %1025
        %v1027 = vsel %vm880, %v1021, -inf
        %1028 = vmax.xlane.f32.xlu0 %v1027
        %v1029 = vpop.xlane.xlu0 %1028
        %v1030 = vsub.f32 %v1002, %v1026
        %v1031 = vsub.f32 %v1021, %v1029
        %v1032 = vmul.f32 %v1030, 1.442695
        %v1033 = vpow.pop %v1032
        %v1034 = vmul.f32 %v1031, 1.442695
        %v1035 = vpow.pop %v1034
        %v1036 = vsel %vm880, %v1033, 0.0
        %1037 = vadd.xlane.f32.xlu0 %v1036
        %v1038 = vpop.xlane.xlu0 %1037
        %v1039 = vsel %vm880, %v1035, 0.0
        %1040 = vadd.xlane.f32.xlu0 %v1039
        %v1041 = vpop.xlane.xlu0 %1040
        %v1042 = vrcp.pop %v1038
        %v1043 = vrcp.pop %v1041
        %v1044 = vmul.f32 %v1033, %v1042
        %v1045 = vmul.f32 %v1035, %v1043
        %v1046 = vpack.c.bf16 %v1044, %v1044
        %v1047 = vpack.c.bf16 %v1045, %v1045
        %v1049 = vsel %vm880, %v1046, 0
        %v1052 = vsel %vm946, %v873, 0
        %1054 = vmatpush.bf16.msra.mxu0 0
        %1055 = vmatpush.bf16.msra.mxu0 0
        %1056 = vmatpush.bf16.msra.mxu0 0
        %1057 = vmatpush.bf16.msra.mxu0 0
        %1058 = vmatpush.bf16.msra.mxu0 0
        %1059 = vmatpush.bf16.msra.mxu0 0
        %1060 = vmatpush.bf16.msra.mxu0 0
        %1061 = vmatpush.bf16.msra.mxu0 %v1052
        %1062 = vmatmul.bf16.gmra.mxu0 %v1049
        %v1063 = vpop.f32.mrf.mxu0
        %v1064 = vadd.f32 0.0, %v1063
        %v1065 = vpop.f32.mrf.mxu0
        %1066 = vdwg.mxu0
        %v1068 = vsel %vm880, %v1047, 0
        %v1071 = vsel %vm946, %v875, 0
        %1073 = vmatpush.bf16.msra.mxu0 0
        %1074 = vmatpush.bf16.msra.mxu0 0
        %1075 = vmatpush.bf16.msra.mxu0 0
        %1076 = vmatpush.bf16.msra.mxu0 0
        %1077 = vmatpush.bf16.msra.mxu0 0
        %1078 = vmatpush.bf16.msra.mxu0 0
        %1079 = vmatpush.bf16.msra.mxu0 0
        %1080 = vmatpush.bf16.msra.mxu0 %v1071
        %1081 = vmatmul.bf16.gmra.mxu0 %v1068
        %v1082 = vpop.f32.mrf.mxu0
        %v1083 = vadd.f32 0.0, %v1082
        %v1084 = vpop.f32.mrf.mxu0
        %1085 = vdwg.mxu0
        %v1086 = vld [vmem:[%s571] sm:$0xf]
        %v1087 = vld [vmem:[%s571 + $0x4] sm:$0xf]
        %v1088 = vpack.c.bf16 %v1064, %v960
        %v1089 = vpack.c.bf16 %v1083, %v979
        %v1091 = vsel %vm880, %v1089, 0
        %v1094 = vsel %vm946, %v1087, 0
        %1096 = vmatpush.bf16.msra.mxu0 0
        %1097 = vmatpush.bf16.msra.mxu0 0
        %1098 = vmatpush.bf16.msra.mxu0 0
        %1099 = vmatpush.bf16.msra.mxu0 0
        %1100 = vmatpush.bf16.msra.mxu0 0
        %1101 = vmatpush.bf16.msra.mxu0 0
        %1102 = vmatpush.bf16.msra.mxu0 0
        %1103 = vmatpush.bf16.msra.mxu0 %v1094
        %1104 = vmatmul.bf16.gmra.mxu0 %v1091
        %v1105 = vpop.f32.mrf.mxu0
        %v1106 = vadd.f32 0.0, %v1105
        %v1107 = vpop.f32.mrf.mxu0
        %v1108 = vadd.f32 0.0, %v1107
        %1109 = vdwg.mxu0
        %v1111 = vsel %vm880, %v1088, 0
        %v1114 = vsel %vm946, %v1086, 0
        %1116 = vmatpush.bf16.msra.mxu0 0
        %1117 = vmatpush.bf16.msra.mxu0 0
        %1118 = vmatpush.bf16.msra.mxu0 0
        %1119 = vmatpush.bf16.msra.mxu0 0
        %1120 = vmatpush.bf16.msra.mxu0 0
        %1121 = vmatpush.bf16.msra.mxu0 0
        %1122 = vmatpush.bf16.msra.mxu0 0
        %1123 = vmatpush.bf16.msra.mxu0 %v1114
        %1124 = vmatmul.bf16.gmra.mxu0 %v1111
        %v1125 = vpop.f32.mrf.mxu0
        %v1126 = vadd.f32 %v1106, %v1125
        %v1127 = vpop.f32.mrf.mxu0
        %v1128 = vadd.f32 %v1108, %v1127
        %1129 = vdwg.mxu0
        %v1130 = vadd.f32 %v608, %v1126
        %v1131 = vadd.f32 %v609, %v1128
        %v1132 = vld [vmem:[%s574] sm:$0x1]
        %v1134 = vperm.slane %v1132, 0
        %v1136 = vadd.f32 %v1130, %v1134
        %v1137 = vadd.f32 %v1131, %v1134
        %v1138 = vld [vmem:[%s577] sm:$0x1]
        %v1139 = vld [vmem:[%s580] sm:$0x1]
        %v1140 = vsel %vm612, %v1136, 0.0
        %1141 = vadd.xlane.f32.xlu0 %v1140
        %v1142 = vpop.xlane.xlu0 %1141
        %v1143 = vsel %vm612, %v1137, 0.0
        %1144 = vadd.xlane.f32.xlu0 %v1143
        %v1145 = vpop.xlane.xlu0 %1144
        %v1146 = vmul.f32 %v1142, %v625
        %v1147 = vmul.f32 %v1145, %v625
        %v1148 = vmul.f32 %v1136, %v1136
        %v1149 = vmul.f32 %v1137, %v1137
        %v1150 = vsel %vm612, %v1148, 0.0
        %1151 = vadd.xlane.f32.xlu0 %v1150
        %v1152 = vpop.xlane.xlu0 %1151
        %v1153 = vsel %vm612, %v1149, 0.0
        %1154 = vadd.xlane.f32.xlu0 %v1153
        %v1155 = vpop.xlane.xlu0 %1154
        %v1156 = vmul.f32 %v1152, %v625
        %v1157 = vmul.f32 %v1155, %v625
        %v1158 = vmul.f32 %v1146, %v1146
        %v1159 = vmul.f32 %v1147, %v1147
        %v1160 = vsub.f32 %v1156, %v1158
        %v1161 = vsub.f32 %v1157, %v1159
        %v1162 = vsub.f32 %v1136, %v1146
        %v1163 = vsub.f32 %v1137, %v1147
        %v1164 = vadd.f32 %v1160, 1e-05
        %v1165 = vadd.f32 %v1161, 1e-05
        %v1166 = vrsqrt.pop %v1164
        %v1167 = vmul.f32 %v1166, %v1164
        %v1168 = vmul.f32 %v1167, %v1166
        %v1169 = vmul.f32 0.5, %v1168
        %v1170 = vsub.f32 1.5, %v1169
        %v1171 = vmul.f32 %v1166, %v1170
        %vm1172 = vweird.f32 %v1164
        %vm1173 = vweird.f32 %v1166
        %vm1174 = vmor %vm1172, %vm1173
        %v1175 = vsel %vm1174, %v1166, %v1171
        %v1176 = vrsqrt.pop %v1165
        %v1177 = vmul.f32 %v1176, %v1165
        %v1178 = vmul.f32 %v1177, %v1176
        %v1179 = vmul.f32 0.5, %v1178
        %v1180 = vsub.f32 1.5, %v1179
        %v1181 = vmul.f32 %v1176, %v1180
        %vm1182 = vweird.f32 %v1165
        %vm1183 = vweird.f32 %v1176
        %vm1184 = vmor %vm1182, %vm1183
        %v1185 = vsel %vm1184, %v1176, %v1181
        %v1186 = vmul.f32 %v1162, %v1175
        %v1187 = vmul.f32 %v1163, %v1185
        %v1189 = vperm.slane %v1138, 0
        %v1191 = vmul.f32 %v1186, %v1189
        %v1192 = vmul.f32 %v1187, %v1189
        %v1194 = vperm.slane %v1139, 0
        %v1196 = vadd.f32 %v1191, %v1194
        %v1197 = vadd.f32 %v1192, %v1194
        %v1198 = vpack.c.bf16 %v1197, %v1196
        %v1199 = vld [vmem:[%s585] sm:$0xf]
        %v1200 = vld [vmem:[%s585 + $0x4] sm:$0xf]
        %v1201 = vld [vmem:[%s585 + $0x8] sm:$0xf]
        %v1202 = vld [vmem:[%s585 + $0xc] sm:$0xf]
        %v1203 = vld [vmem:[%s588] sm:$0x1]
        %v1205 = vperm.slane %v1203, 0
        %v1211 = vunpack.c.l.b16 %v1199
        %v1212 = vunpack.c.l.b16 %v1200
        %v1213 = vunpack.c.l.b16 %v1201
        %v1214 = vunpack.c.l.b16 %v1202
        %v1215 = vpack.c.b16 %v1212, %v1211
        %v1216 = vpack.c.b16 %v1214, %v1213
        %v1220 = vsel %vm612, %v1198, 0
        %1222 = vmatpush.bf16.msra.mxu0 0
        %1223 = vmatpush.bf16.msra.mxu0 0
        %1224 = vmatpush.bf16.msra.mxu0 0
        %1225 = vmatpush.bf16.msra.mxu0 0
        %1226 = vmatpush.bf16.msra.mxu0 0
        %1227 = vmatpush.bf16.msra.mxu0 0
        %1228 = vmatpush.bf16.msra.mxu0 %v1216
        %1229 = vmatpush.bf16.msra.mxu0 %v1215
        %1230 = vmatmul.bf16.gmra.mxu0 %v1220
        %v1231 = vpop.f32.mrf.mxu0
        %v1232 = vadd.f32 %v1205, %v1231
        %v1233 = vpop.f32.mrf.mxu0
        %v1234 = vadd.f32 %v1205, %v1233
        %1235 = vdwg.mxu0
        %v1236 = vmul.f32 %v1232, 0.5
        %v1237 = vmul.f32 %v1234, 0.5
        %v1238 = vmul.f32 %v1232, 0.70710677
        %v1239 = vmul.f32 %v1234, 0.70710677
        %v1240 = vmul.f32 %v1238, %v1238
        %v1241 = vmin.f32 16.0, %v1240
        %v1242 = vmul.f32 %v1241, 2.1237322e-06
        %v1243 = vadd.f32 %v1242, 0.00028619796
        %v1244 = vmul.f32 %v1241, %v1243
        %v1245 = vadd.f32 %v1244, 0.0036580483
        %v1246 = vmul.f32 %v1241, %v1245
        %v1247 = vadd.f32 %v1246, 0.05243302
        %v1248 = vmul.f32 %v1241, %v1247
        %v1249 = vadd.f32 %v1248, 0.18741608
        %v1250 = vmul.f32 %v1241, %v1249
        %v1251 = vadd.f32 %v1250, 1.1283791
        %v1252 = vmul.f32 %v1238, %v1251
        %v1253 = vmul.f32 %v1241, 3.8918573e-05
        %v1254 = vadd.f32 %v1253, 0.001143296
        %v1255 = vmul.f32 %v1241, %v1254
        %v1256 = vadd.f32 %v1255, 0.014752088
        %v1257 = vmul.f32 %v1241, %v1256
        %v1258 = vadd.f32 %v1257, 0.112945676
        %v1259 = vmul.f32 %v1241, %v1258
        %v1260 = vadd.f32 %v1259, 0.4994258
        %v1261 = vmul.f32 %v1241, %v1260
        %v1262 = vadd.f32 %v1261, 1.0
        %v1263 = vrcp.pop %v1262
        %v1264 = vmul.f32 %v1262, %v1263
        %v1265 = vsub.f32 1.0, %v1264
        %v1266 = vmul.f32 %v1263, %v1265
        %v1267 = vadd.f32 %v1263, %v1266
        %vm1268 = vweird.f32 %v1262
        %vm1269 = vweird.f32 %v1263
        %vm1270 = vmor %vm1268, %vm1269
        %v1271 = vsel %vm1270, %v1263, %v1267
        %v1272 = vand.u32 2147483647, %v1262
        %vm1273 = vcmp.eq.f32.partialorder %v1272, 8.507059e+37
        %v1274 = vand.u32 %v1262, 2147483648
        %v1275 = vor.u32 1.1754944e-38, %v1274
        %v1276 = vsel %vm1273, %v1275, %v1271
        %v1277 = vmul.f32 %v1252, %v1276
        %v1278 = vmin.f32 %v1277, 1.0
        %v1279 = vmax.f32 %v1278, -1.0
        %v1280 = vmul.f32 %v1239, %v1239
        %v1281 = vmin.f32 16.0, %v1280
        %v1282 = vmul.f32 %v1281, 2.1237322e-06
        %v1283 = vadd.f32 %v1282, 0.00028619796
        %v1284 = vmul.f32 %v1281, %v1283
        %v1285 = vadd.f32 %v1284, 0.0036580483
        %v1286 = vmul.f32 %v1281, %v1285
        %v1287 = vadd.f32 %v1286, 0.05243302
        %v1288 = vmul.f32 %v1281, %v1287
        %v1289 = vadd.f32 %v1288, 0.18741608
        %v1290 = vmul.f32 %v1281, %v1289
        %v1291 = vadd.f32 %v1290, 1.1283791
        %v1292 = vmul.f32 %v1239, %v1291
        %v1293 = vmul.f32 %v1281, 3.8918573e-05
        %v1294 = vadd.f32 %v1293, 0.001143296
        %v1295 = vmul.f32 %v1281, %v1294
        %v1296 = vadd.f32 %v1295, 0.014752088
        %v1297 = vmul.f32 %v1281, %v1296
        %v1298 = vadd.f32 %v1297, 0.112945676
        %v1299 = vmul.f32 %v1281, %v1298
        %v1300 = vadd.f32 %v1299, 0.4994258
        %v1301 = vmul.f32 %v1281, %v1300
        %v1302 = vadd.f32 %v1301, 1.0
        %v1303 = vrcp.pop %v1302
        %v1304 = vmul.f32 %v1302, %v1303
        %v1305 = vsub.f32 1.0, %v1304
        %v1306 = vmul.f32 %v1303, %v1305
        %v1307 = vadd.f32 %v1303, %v1306
        %vm1308 = vweird.f32 %v1302
        %vm1309 = vweird.f32 %v1303
        %vm1310 = vmor %vm1308, %vm1309
        %v1311 = vsel %vm1310, %v1303, %v1307
        %v1312 = vand.u32 2147483647, %v1302
        %vm1313 = vcmp.eq.f32.partialorder %v1312, 8.507059e+37
        %v1314 = vand.u32 %v1302, 2147483648
        %v1315 = vor.u32 1.1754944e-38, %v1314
        %v1316 = vsel %vm1313, %v1315, %v1311
        %v1317 = vmul.f32 %v1292, %v1316
        %v1318 = vmin.f32 %v1317, 1.0
        %v1319 = vmax.f32 %v1318, -1.0
        %v1320 = vadd.f32 %v1279, 1.0
        %v1321 = vadd.f32 %v1319, 1.0
        %v1322 = vmul.f32 %v1236, %v1320
        %v1323 = vmul.f32 %v1237, %v1321
        %v1324 = vpack.c.bf16 %v1323, %v1322
        %v1325 = vld [vmem:[%s593] sm:$0xf]
        %v1326 = vld [vmem:[%s593 + $0x4] sm:$0xf]
        %v1327 = vld [vmem:[%s593 + $0x8] sm:$0xf]
        %v1328 = vld [vmem:[%s593 + $0xc] sm:$0xf]
        %v1329 = vld [vmem:[%s593 + $0x10] sm:$0xf]
        %v1330 = vld [vmem:[%s593 + $0x14] sm:$0xf]
        %v1331 = vld [vmem:[%s593 + $0x18] sm:$0xf]
        %v1332 = vld [vmem:[%s593 + $0x1c] sm:$0xf]
        %v1333 = vld [vmem:[%s596] sm:$0x1]
        %v1335 = vperm.slane %v1333, 0
        %v1345 = vunpack.c.l.b16 %v1325
        %v1346 = vunpack.c.l.b16 %v1326
        %v1347 = vunpack.c.l.b16 %v1327
        %v1348 = vunpack.c.l.b16 %v1328
        %v1349 = vunpack.c.l.b16 %v1329
        %v1350 = vunpack.c.l.b16 %v1330
        %v1351 = vunpack.c.l.b16 %v1331
        %v1352 = vunpack.c.l.b16 %v1332
        %v1353 = vpack.c.b16 %v1346, %v1345
        %v1354 = vpack.c.b16 %v1348, %v1347
        %v1355 = vpack.c.b16 %v1350, %v1349
        %v1356 = vpack.c.b16 %v1352, %v1351
        %vm1361 = vcmask 523264
        %v1363 = vsel %vm1361, %v1324, 0
        %1365 = vmatpush.bf16.msra.mxu0 0
        %1366 = vmatpush.bf16.msra.mxu0 0
        %1367 = vmatpush.bf16.msra.mxu0 0
        %1368 = vmatpush.bf16.msra.mxu0 0
        %1369 = vmatpush.bf16.msra.mxu0 %v1356
        %1370 = vmatpush.bf16.msra.mxu0 %v1355
        %1371 = vmatpush.bf16.msra.mxu0 %v1354
        %1372 = vmatpush.bf16.msra.mxu0 %v1353
        %1373 = vmatmul.bf16.gmra.mxu0 %v1363
        %v1374 = vpop.f32.mrf.mxu0
        %v1375 = vadd.f32 %v1335, %v1374
        %v1376 = vpop.f32.mrf.mxu0
        %v1377 = vadd.f32 %v1335, %v1376
        %1378 = vdwg.mxu0
        %v1379 = vadd.f32 %v1136, %v1375
        %v1380 = vadd.f32 %v1137, %v1377
        %1381 = vst.msk [vmem:[#allocation2] sm:$0xff] %vm612, %v1379
        %1382 = vst.msk [vmem:[#allocation2 + $0x8] sm:$0xff] %vm612, %v1380
        %p1383 = scmp.eq.s32.totalorder %s29, 1
        // Predicated region
        $region73: #{tpu_custom_call.1} parent=67 // pred_check
          %p1384 = pneg %p1383
        $region74: #{tpu_custom_call.1} parent=67 // pred_check_branch
          %1386 = sbr.rel (%p1384) target = $region76
        $region75: #{tpu_custom_call.1} parent=67 // pred_region
          %1387 = vst.msk [vmem:[#allocation3] sm:$0xff] %vm612, %v1379
          %1388 = vst.msk [vmem:[#allocation3 + $0x8] sm:$0xff] %vm612, %v1380
        $region76: #{tpu_custom_call.1} parent=67 // pred_fallthru
          _
        // Predicated region
        $region77: #{tpu_custom_call.1} parent=67 // pred_check
          %p1389 = pneg %p366
        $region78: #{tpu_custom_call.1} parent=67 // pred_check_branch
          %1391 = sbr.rel (%p1389) target = $region80
        $region79: #{tpu_custom_call.1} parent=67 // pred_region
          %s1392 = smul.u32 2, %s28
          %1394 = vsyncadd [#allocation4], 0
          %s1395 = smul.addr %s1392, 8
          %s1396 = scalar_lea.hbm %s12, %s1395
          %s1397 = sshll.u32 [#allocation3], 4
          %s1398 = int_to_ptr.vmem [resolvable:$true] %s1397
          %s1399 = sshll.u32 %s1396, 4
          %s1400 = int_to_ptr.hbm [resolvable:$true] %s1399
          %1405 = dma.vmem_to_hbm [thread:$0]  %s1398, 256, %s1400, [#allocation4], 128, 128, 8
        $region80: #{tpu_custom_call.1} parent=67 // pred_fallthru
          _
        // Predicated region
        $region81: #{tpu_custom_call.1} parent=67 // pred_check
          %p1406 = pneg %p366
        $region82: #{tpu_custom_call.1} parent=67 // pred_check_branch
          %1408 = sbr.rel (%p1406) target = $region84
        $region83: #{tpu_custom_call.1} parent=67 // pred_region
          %1410 = dma.done [#allocation4], 256
        $region84: #{tpu_custom_call.1} parent=67 // pred_fallthru
          _
      $region68: #{tpu_custom_call.1} parent=5 // pred_fallthru
        _
      %p1411 = scmp.le.s32.totalorder 2, %s19
      // Predicated region
      $region85: #{tpu_custom_call.1} parent=5 // pred_check
        %p1412 = pneg %p1411
      $region86: #{tpu_custom_call.1} parent=5 // pred_check_branch
        %1414 = sbr.rel (%p1412) target = $region88
      $region87: #{tpu_custom_call.1} parent=5 // pred_region
        %s1415 = ssub.s32 %s19, 2
      $region88: #{tpu_custom_call.1} parent=5 // pred_fallthru
        _
    $region6: #{tpu_custom_call.1} parent=1 // loop_footer
      %s23 = sadd.s32 1, %s19
    $region7: #{tpu_custom_call.1} parent=1 // loop_footer_branch
      %18 = sbr.rel target = $region3
    $region8: #{tpu_custom_call.1} parent=1 // loop_exit
      _
    %1416 = vsyncpa [#allocation4], 1
    %s1417 = scalar_lea.sflag [#allocation4], 1
    %1418 = vsyncpa %s1417, 1

</llo_original>
